<compile_context>
chip_gen: v7x
topology: tpu7x:2x2x1
jax: 0.10.0
libtpu: 0.0.40
codegen_flags: <defaults>
</compile_context>

<pallas_src>
import functools

import jax
import jax.numpy as jnp
from jax import lax
from jax.experimental import pallas as pl
from jax.experimental.pallas import tpu as pltpu

BN_EPS = 1e-3  # nn.BatchNorm2d(eps=0.001)


def _fold_bn(gamma, beta, mean, var, eps=BN_EPS):
    scale = gamma / jnp.sqrt(var + eps)
    bias = beta - mean * scale
    return scale, bias


# ---------------------------------------------------------------------------
# Fused kernel: one batch image per grid step.
#   x (HW, Cin) -> BN_w/ReLU -> 1x1 proj (augmented)            -> acc
#               -> BN_a/ReLU -> 1x1 a -> BN_b/ReLU -> 3x3 group -> BN_c/ReLU
#               -> 1x1 c (augmented)                            -> acc (+=)
#   acc = [resid | x_s2 | out2]  written with a single store.
# ---------------------------------------------------------------------------
def _dpn_fused_kernel(x_ref,
                      sw_ref, bw_ref, sa_ref, ba_ref,
                      sb_ref, bb_ref, sc_ref, bc_ref,
                      wproj_ref, wa_ref, wb_ref, wc_ref,
                      out_ref, ypad_ref, *, H, W, pad):
    HW = H * W
    n_b = wc_ref.shape[0]

    x = x_ref[0]  # (HW, Cin)

    # --- projection path: BN -> ReLU -> 1x1 (augmented to combined width) ---
    y_w = jnp.maximum(x * sw_ref[...] + bw_ref[...], 0.0)
    acc = jnp.dot(y_w, wproj_ref[...], preferred_element_type=jnp.float32)

    # --- main path: BN -> ReLU -> 1x1 (a) ------------------------------------
    y_in = jnp.maximum(x * sa_ref[...] + ba_ref[...], 0.0)
    x_a = jnp.dot(y_in, wa_ref[...], preferred_element_type=jnp.float32)

    # --- BN -> ReLU, stage into zero-padded flat scratch (aligned store) -----
    y_b = jnp.maximum(x_a * sb_ref[...] + bb_ref[...], 0.0)
    ypad_ref[...] = jnp.zeros_like(ypad_ref)
    ypad_ref[pad:pad + HW, :] = y_b  # pad is a multiple of 8 -> aligned

    # --- grouped 3x3 conv (stride 1, pad 1) as 9 shifted dense matmuls -------
    # per-tap weight is block-diagonal dense (n_a, n_b); vertical (H) padding
    # is supplied by the zero rows of the scratch, horizontal (W) wrap-around
    # is killed with a cheap row mask.
    w_idx = lax.broadcasted_iota(jnp.int32, (HW, n_b), 0) % W
    x_b = jnp.zeros((HW, n_b), jnp.float32)
    tap = 0
    for dy in (-1, 0, 1):
        for dx in (-1, 0, 1):
            ys = ypad_ref[pl.ds(pad + dy * W + dx, HW), :]
            z = jnp.dot(ys, wb_ref[tap], preferred_element_type=jnp.float32)
            if dx == -1:
                z = jnp.where(w_idx > 0, z, 0.0)
            elif dx == 1:
                z = jnp.where(w_idx < W - 1, z, 0.0)
            x_b = x_b + z
            tap += 1

    # --- BN -> ReLU -> 1x1 (c, augmented) accumulated into combined output ---
    y_c = jnp.maximum(x_b * sc_ref[...] + bc_ref[...], 0.0)
    acc = acc + jnp.dot(y_c, wc_ref[...], preferred_element_type=jnp.float32)

    out_ref[0] = acc  # single full-width store


# ---------------------------------------------------------------------------
# Wrapper: NCHW -> flat NHWC, trace-time weight prep, one pallas_call.
# ---------------------------------------------------------------------------
def dual_path_block_forward(x_nchw, params, cfg):
    N, C, H, W = x_nchw.shape
    n_a, n_b = cfg["num_1x1_a"], cfg["num_3x3_b"]
    n_c, inc, G = cfg["num_1x1_c"], cfg["inc"], cfg["groups"]
    HW = H * W
    out_w = n_c + 3 * inc
    PAD = max(8, ((W + 1 + 7) // 8) * 8)  # sublane-aligned, >= W+1

    x_flat = jnp.transpose(x_nchw, (0, 2, 3, 1)).reshape(N, HW, C)

    # Fold BN running stats (inference semantics).
    s_w, b_w = _fold_bn(*params["bn_w"])
    s_a, b_a = _fold_bn(*params["bn_a"])
    s_b, b_b = _fold_bn(*params["bn_b"])
    s_c, b_c = _fold_bn(*params["bn_c"])

    # Column-augment the two "output" 1x1 weights so the kernel produces one
    # combined [resid | x_s2 | out2] slab:  acc = y_w @ Wp_aug + y_c @ Wc_aug.
    w_proj_aug = jnp.concatenate(
        [params["w_proj"], jnp.zeros((C, inc), jnp.float32)], axis=1)
    w_c = params["w_c"]
    w_c_aug = jnp.concatenate(
        [w_c[:, :n_c], jnp.zeros((n_b, 2 * inc), jnp.float32), w_c[:, n_c:]],
        axis=1)

    # Block-diagonal dense per-tap weights for the grouped 3x3 conv.
    cin_g, cout_g = n_a // G, n_b // G
    wg = params["w_b_pt"].reshape(G, cout_g, cin_g, 3, 3)
    wg = jnp.transpose(wg, (3, 4, 0, 2, 1)).reshape(9, G, cin_g, cout_g)
    w_b_taps = jnp.zeros((9, n_a, n_b), jnp.float32)
    for g in range(G):
        w_b_taps = w_b_taps.at[
            :, g * cin_g:(g + 1) * cin_g, g * cout_g:(g + 1) * cout_g].set(wg[:, g])

    vec = lambda v: v.reshape(1, -1)
    kernel = functools.partial(_dpn_fused_kernel, H=H, W=W, pad=PAD)

    out = pl.pallas_call(
        kernel,
        out_shape=jax.ShapeDtypeStruct((N, HW, out_w), jnp.float32),
        grid=(N,),
        in_specs=[
            pl.BlockSpec((1, HW, C), lambda n: (n, 0, 0)),
            pl.BlockSpec((1, C), lambda n: (0, 0)),
            pl.BlockSpec((1, C), lambda n: (0, 0)),
            pl.BlockSpec((1, C), lambda n: (0, 0)),
            pl.BlockSpec((1, C), lambda n: (0, 0)),
            pl.BlockSpec((1, n_a), lambda n: (0, 0)),
            pl.BlockSpec((1, n_a), lambda n: (0, 0)),
            pl.BlockSpec((1, n_b), lambda n: (0, 0)),
            pl.BlockSpec((1, n_b), lambda n: (0, 0)),
            pl.BlockSpec((C, out_w), lambda n: (0, 0)),
            pl.BlockSpec((C, n_a), lambda n: (0, 0)),
            pl.BlockSpec((9, n_a, n_b), lambda n: (0, 0, 0)),
            pl.BlockSpec((n_b, out_w), lambda n: (0, 0)),
        ],
        out_specs=pl.BlockSpec((1, HW, out_w), lambda n: (n, 0, 0)),
        scratch_shapes=[pltpu.VMEM((PAD + HW + PAD, n_a), jnp.float32)],
        compiler_params=pltpu.CompilerParams(
            dimension_semantics=("parallel",)),
    )(x_flat,
      vec(s_w), vec(b_w), vec(s_a), vec(b_a),
      vec(s_b), vec(b_b), vec(s_c), vec(b_c),
      w_proj_aug, params["w_a"], w_b_taps, w_c_aug)

    out = out.reshape(N, H, W, out_w)
    resid = jnp.transpose(out[..., :n_c], (0, 3, 1, 2))
    dense = jnp.transpose(out[..., n_c:], (0, 3, 1, 2))
    return resid, dense


# ---------------------------------------------------------------------------
# Pure-JAX reference for verification
# ---------------------------------------------------------------------------
def reference_forward(x_nchw, params, cfg):
    num_1x1_c, groups = cfg["num_1x1_c"], cfg["groups"]
    x = jnp.transpose(x_nchw, (0, 2, 3, 1))

    def bn_act(t, bnp):
        s, b = _fold_bn(*bnp)
        return jnp.maximum(t * s + b, 0.0)

    hp = lax.Precision.HIGHEST
    x_s = jnp.einsum("nhwc,cd->nhwd", bn_act(x, params["bn_w"]),
                     params["w_proj"], precision=hp)
    x_a = jnp.einsum("nhwc,cd->nhwd", bn_act(x, params["bn_a"]),
                     params["w_a"], precision=hp)
    w_hwio = jnp.transpose(params["w_b_pt"], (2, 3, 1, 0))
    x_b = lax.conv_general_dilated(
        bn_act(x_a, params["bn_b"]), w_hwio, (1, 1), ((1, 1), (1, 1)),
        dimension_numbers=("NHWC", "HWIO", "NHWC"),
        feature_group_count=groups, precision=hp)
    out = jnp.einsum("nhwc,cd->nhwd", bn_act(x_b, params["bn_c"]),
                     params["w_c"], precision=hp)
    resid = x_s[..., :num_1x1_c] + out[..., :num_1x1_c]
    dense = jnp.concatenate([x_s[..., num_1x1_c:], out[..., num_1x1_c:]], -1)
    return (jnp.transpose(resid, (0, 3, 1, 2)),
            jnp.transpose(dense, (0, 3, 1, 2)))


# ---------------------------------------------------------------------------
# Deterministic parameter init (PyTorch layouts, then converted)
# ---------------------------------------------------------------------------
def init_bn(key, c):
    k1, k2, k3, k4 = jax.random.split(key, 4)
    gamma = 1.0 + 0.1 * jax.random.normal(k1, (c,), jnp.float32)
    beta = 0.1 * jax.random.normal(k2, (c,), jnp.float32)
    mean = 0.1 * jax.random.normal(k3, (c,), jnp.float32)
    var = 1.0 + 0.1 * jnp.abs(jax.random.normal(k4, (c,), jnp.float32))
    return gamma, beta, mean, var


def init_params(key, cfg):
    in_chs, n_a, n_b = cfg["in_chs"], cfg["num_1x1_a"], cfg["num_3x3_b"]
    n_c, inc, G = cfg["num_1x1_c"], cfg["inc"], cfg["groups"]
    keys = jax.random.split(key, 8)
    # PyTorch 1x1 conv weights (Cout, Cin, 1, 1) -> (Cin, Cout) matmul weights
    w_proj = 0.1 * jax.random.normal(keys[0], (n_c + 2 * inc, in_chs), jnp.float32)
    w_a = 0.1 * jax.random.normal(keys[1], (n_a, in_chs), jnp.float32)
    w_c = 0.1 * jax.random.normal(keys[2], (n_c + inc, n_b), jnp.float32)
    # PyTorch grouped conv weight layout (Cout, Cin/G, 3, 3)
    w_b_pt = 0.1 * jax.random.normal(keys[3], (n_b, n_a // G, 3, 3), jnp.float32)
    return {
        "bn_w": init_bn(keys[4], in_chs),
        "bn_a": init_bn(keys[5], in_chs),
        "bn_b": init_bn(keys[6], n_a),
        "bn_c": init_bn(keys[7], n_b),
        "w_proj": jnp.transpose(w_proj),
        "w_a": jnp.transpose(w_a),
        "w_c": jnp.transpose(w_c),
        "w_b_pt": w_b_pt,
    }


if __name__ == "__main__":
    cfg = dict(in_chs=16, num_1x1_a=16, num_3x3_b=16, num_1x1_c=16,
               inc=8, groups=4, block_type="proj", b=False)

    key = jax.random.PRNGKey(0)
    kx, kp = jax.random.split(key)
    x = jax.random.normal(kx, (2, cfg["in_chs"], 8, 8), jnp.float32)  # NCHW
    params = init_params(kp, cfg)

    fwd = jax.jit(lambda xx, pp: dual_path_block_forward(xx, pp, cfg))
    resid, dense = jax.block_until_ready(fwd(x, params))

    r_ref, d_ref = reference_forward(x, params, cfg)
    assert resid.shape == (2, cfg["num_1x1_c"], 8, 8)
    assert dense.shape == (2, 3 * cfg["inc"], 8, 8)
    assert bool(jnp.allclose(resid, r_ref, atol=1e-3, rtol=1e-3))
    assert bool(jnp.allclose(dense, d_ref, atol=1e-3, rtol=1e-3))

    print("KERNEL_OK")
</pallas_src>

<mosaic_0001>
module attributes {stable_mosaic.version = 11 : i64} {
  func.func @_dpn_fused_kernel(%arg0: i32, %arg1: memref<1x64x16xf32, #tpu.memory_space<vmem>>, %arg2: memref<1x16xf32, #tpu.memory_space<vmem>>, %arg3: memref<1x16xf32, #tpu.memory_space<vmem>>, %arg4: memref<1x16xf32, #tpu.memory_space<vmem>>, %arg5: memref<1x16xf32, #tpu.memory_space<vmem>>, %arg6: memref<1x16xf32, #tpu.memory_space<vmem>>, %arg7: memref<1x16xf32, #tpu.memory_space<vmem>>, %arg8: memref<1x16xf32, #tpu.memory_space<vmem>>, %arg9: memref<1x16xf32, #tpu.memory_space<vmem>>, %arg10: memref<16x40xf32, #tpu.memory_space<vmem>>, %arg11: memref<16x16xf32, #tpu.memory_space<vmem>>, %arg12: memref<9x16x16xf32, #tpu.memory_space<vmem>>, %arg13: memref<16x40xf32, #tpu.memory_space<vmem>>, %arg14: memref<1x64x40xf32, #tpu.memory_space<vmem>>, %arg15: memref<96x16xf32, #tpu.memory_space<vmem>>) attributes {dimension_semantics = [#tpu.dimension_semantics<parallel>], iteration_bounds = array<i64: 2>, scalar_prefetch = 0 : i64, scratch_operands = 1 : i64, tpu.core_type = #tpu.core_type<tc>, window_params = [{transform_indices = @transform_0, window_bounds = array<i64: 1, 64, 16>}, {pipeline_mode = #tpu.pipeline_mode<synchronous>, transform_indices = @transform_1, window_bounds = array<i64: 1, 16>}, {pipeline_mode = #tpu.pipeline_mode<synchronous>, transform_indices = @transform_2, window_bounds = array<i64: 1, 16>}, {pipeline_mode = #tpu.pipeline_mode<synchronous>, transform_indices = @transform_3, window_bounds = array<i64: 1, 16>}, {pipeline_mode = #tpu.pipeline_mode<synchronous>, transform_indices = @transform_4, window_bounds = array<i64: 1, 16>}, {pipeline_mode = #tpu.pipeline_mode<synchronous>, transform_indices = @transform_5, window_bounds = array<i64: 1, 16>}, {pipeline_mode = #tpu.pipeline_mode<synchronous>, transform_indices = @transform_6, window_bounds = array<i64: 1, 16>}, {pipeline_mode = #tpu.pipeline_mode<synchronous>, transform_indices = @transform_7, window_bounds = array<i64: 1, 16>}, {pipeline_mode = #tpu.pipeline_mode<synchronous>, transform_indices = @transform_8, window_bounds = array<i64: 1, 16>}, {pipeline_mode = #tpu.pipeline_mode<synchronous>, transform_indices = @transform_9, window_bounds = array<i64: 16, 40>}, {pipeline_mode = #tpu.pipeline_mode<synchronous>, transform_indices = @transform_10, window_bounds = array<i64: 16, 16>}, {pipeline_mode = #tpu.pipeline_mode<synchronous>, transform_indices = @transform_11, window_bounds = array<i64: 9, 16, 16>}, {pipeline_mode = #tpu.pipeline_mode<synchronous>, transform_indices = @transform_12, window_bounds = array<i64: 16, 40>}, {transform_indices = @transform_13, window_bounds = array<i64: 1, 64, 40>}]} {
    %c0 = arith.constant 0 : index
    %c0_0 = arith.constant 0 : index
    %c0_1 = arith.constant 0 : index
    %0 = vector.load %arg1[%c0, %c0_0, %c0_1] : memref<1x64x16xf32, #tpu.memory_space<vmem>>, vector<1x64x16xf32>
    %1 = vector.shape_cast %0 : vector<1x64x16xf32> to vector<64x16xf32>
    %c0_2 = arith.constant 0 : index
    %c0_3 = arith.constant 0 : index
    %2 = vector.load %arg2[%c0_2, %c0_3] : memref<1x16xf32, #tpu.memory_space<vmem>>, vector<1x16xf32>
    %3 = vector.broadcast %2 : vector<1x16xf32> to vector<64x16xf32>
    %4 = arith.mulf %1, %3 : vector<64x16xf32>
    %c0_4 = arith.constant 0 : index
    %c0_5 = arith.constant 0 : index
    %5 = vector.load %arg3[%c0_4, %c0_5] : memref<1x16xf32, #tpu.memory_space<vmem>>, vector<1x16xf32>
    %6 = vector.broadcast %5 : vector<1x16xf32> to vector<64x16xf32>
    %7 = arith.addf %4, %6 : vector<64x16xf32>
    %cst = arith.constant 0.000000e+00 : f32
    %8 = vector.broadcast %cst : f32 to vector<64x16xf32>
    %9 = arith.maximumf %7, %8 : vector<64x16xf32>
    %c0_6 = arith.constant 0 : index
    %c0_7 = arith.constant 0 : index
    %10 = vector.load %arg10[%c0_6, %c0_7] : memref<16x40xf32, #tpu.memory_space<vmem>>, vector<16x40xf32>
    %cst_8 = arith.constant dense<0.000000e+00> : vector<64x40xf32>
    %11 = tpu.matmul %9, %10, %cst_8 {dimension_numbers = #tpu.dot_dimension_numbers<[1], [0], [0], [1], [0, 0, 1, 1], [], []>} : vector<64x16xf32>, vector<16x40xf32>, vector<64x40xf32> -> vector<64x40xf32>
    %c0_9 = arith.constant 0 : index
    %c0_10 = arith.constant 0 : index
    %12 = vector.load %arg4[%c0_9, %c0_10] : memref<1x16xf32, #tpu.memory_space<vmem>>, vector<1x16xf32>
    %13 = vector.broadcast %12 : vector<1x16xf32> to vector<64x16xf32>
    %14 = arith.mulf %1, %13 : vector<64x16xf32>
    %c0_11 = arith.constant 0 : index
    %c0_12 = arith.constant 0 : index
    %15 = vector.load %arg5[%c0_11, %c0_12] : memref<1x16xf32, #tpu.memory_space<vmem>>, vector<1x16xf32>
    %16 = vector.broadcast %15 : vector<1x16xf32> to vector<64x16xf32>
    %17 = arith.addf %14, %16 : vector<64x16xf32>
    %cst_13 = arith.constant 0.000000e+00 : f32
    %18 = vector.broadcast %cst_13 : f32 to vector<64x16xf32>
    %19 = arith.maximumf %17, %18 : vector<64x16xf32>
    %c0_14 = arith.constant 0 : index
    %c0_15 = arith.constant 0 : index
    %20 = vector.load %arg11[%c0_14, %c0_15] : memref<16x16xf32, #tpu.memory_space<vmem>>, vector<16x16xf32>
    %cst_16 = arith.constant dense<0.000000e+00> : vector<64x16xf32>
    %21 = tpu.matmul %19, %20, %cst_16 {dimension_numbers = #tpu.dot_dimension_numbers<[1], [0], [0], [1], [0, 0, 1, 1], [], []>} : vector<64x16xf32>, vector<16x16xf32>, vector<64x16xf32> -> vector<64x16xf32>
    %c0_17 = arith.constant 0 : index
    %c0_18 = arith.constant 0 : index
    %22 = vector.load %arg6[%c0_17, %c0_18] : memref<1x16xf32, #tpu.memory_space<vmem>>, vector<1x16xf32>
    %23 = vector.broadcast %22 : vector<1x16xf32> to vector<64x16xf32>
    %24 = arith.mulf %21, %23 : vector<64x16xf32>
    %c0_19 = arith.constant 0 : index
    %c0_20 = arith.constant 0 : index
    %25 = vector.load %arg7[%c0_19, %c0_20] : memref<1x16xf32, #tpu.memory_space<vmem>>, vector<1x16xf32>
    %26 = vector.broadcast %25 : vector<1x16xf32> to vector<64x16xf32>
    %27 = arith.addf %24, %26 : vector<64x16xf32>
    %cst_21 = arith.constant 0.000000e+00 : f32
    %28 = vector.broadcast %cst_21 : f32 to vector<64x16xf32>
    %29 = arith.maximumf %27, %28 : vector<64x16xf32>
    %cst_22 = arith.constant 0.000000e+00 : f32
    %30 = vector.broadcast %cst_22 : f32 to vector<96x16xf32>
    %c0_23 = arith.constant 0 : index
    %c0_24 = arith.constant 0 : index
    %31 = vector.load %arg15[%c0_23, %c0_24] : memref<96x16xf32, #tpu.memory_space<vmem>>, vector<96x16xf32>
    tpu.vector_store %arg15[%c0_23, %c0_24], %30 {strides = array<i32>} : memref<96x16xf32, #tpu.memory_space<vmem>>, vector<96x16xf32>,
    %c16 = arith.constant 16 : index
    %c0_25 = arith.constant 0 : index
    %32 = vector.load %arg15[%c16, %c0_25] : memref<96x16xf32, #tpu.memory_space<vmem>>, vector<64x16xf32>
    tpu.vector_store %arg15[%c16, %c0_25], %29 {strides = array<i32>} : memref<96x16xf32, #tpu.memory_space<vmem>>, vector<64x16xf32>,
    %33 = tpu.iota {dimensions = array<i32: 0>} : vector<64x16xi32>
    %c8_i32 = arith.constant 8 : i32
    %c0_i32 = arith.constant 0 : i32
    %34 = arith.cmpi eq, %c8_i32, %c0_i32 : i32
    %c1_i32 = arith.constant 1 : i32
    %35 = arith.select %34, %c1_i32, %c8_i32 : i32
    %36 = vector.broadcast %35 : i32 to vector<64x16xi32>
    %37 = arith.remsi %33, %36 : vector<64x16xi32>
    %c0_i32_26 = arith.constant 0 : i32
    %38 = vector.broadcast %c0_i32_26 : i32 to vector<64x16xi32>
    %39 = arith.cmpi ne, %37, %38 : vector<64x16xi32>
    %c0_i32_27 = arith.constant 0 : i32
    %40 = vector.broadcast %c0_i32_27 : i32 to vector<64x16xi32>
    %41 = arith.cmpi slt, %37, %40 : vector<64x16xi32>
    %c0_i32_28 = arith.constant 0 : i32
    %42 = arith.cmpi slt, %35, %c0_i32_28 : i32
    %43 = vector.broadcast %42 : i1 to vector<64x16xi1>
    %44 = vector.broadcast %43 : vector<64x16xi1> to vector<64x16xi1>
    %45 = arith.xori %41, %44 : vector<64x16xi1>
    %46 = arith.andi %45, %39 : vector<64x16xi1>
    %47 = vector.broadcast %35 : i32 to vector<64x16xi32>
    %48 = arith.addi %37, %47 : vector<64x16xi32>
    %49 = arith.select %46, %48, %37 : vector<64x16xi1>, vector<64x16xi32>
    %cst_29 = arith.constant 0.000000e+00 : f32
    %50 = vector.broadcast %cst_29 : f32 to vector<64x16xf32>
    %c7 = arith.constant 7 : index
    %c0_30 = arith.constant 0 : index
    %51 = vector.load %arg15[%c7, %c0_30] : memref<96x16xf32, #tpu.memory_space<vmem>>, vector<64x16xf32>
    %c0_31 = arith.constant 0 : index
    %c0_32 = arith.constant 0 : index
    %c0_33 = arith.constant 0 : index
    %52 = vector.load %arg12[%c0_31, %c0_32, %c0_33] : memref<9x16x16xf32, #tpu.memory_space<vmem>>, vector<1x16x16xf32>
    %53 = vector.shape_cast %52 : vector<1x16x16xf32> to vector<16x16xf32>
    %cst_34 = arith.constant dense<0.000000e+00> : vector<64x16xf32>
    %54 = tpu.matmul %51, %53, %cst_34 {dimension_numbers = #tpu.dot_dimension_numbers<[1], [0], [0], [1], [0, 0, 1, 1], [], []>} : vector<64x16xf32>, vector<16x16xf32>, vector<64x16xf32> -> vector<64x16xf32>
    %c0_i32_35 = arith.constant 0 : i32
    %55 = vector.broadcast %c0_i32_35 : i32 to vector<64x16xi32>
    %56 = arith.cmpi sgt, %49, %55 : vector<64x16xi32>
    %cst_36 = arith.constant 0.000000e+00 : f32
    %57 = vector.broadcast %cst_36 : f32 to vector<64x16xf32>
    %58 = arith.select %56, %54, %57 : vector<64x16xi1>, vector<64x16xf32>
    %59 = arith.addf %50, %58 : vector<64x16xf32>
    %c8 = arith.constant 8 : index
    %c0_37 = arith.constant 0 : index
    %60 = vector.load %arg15[%c8, %c0_37] : memref<96x16xf32, #tpu.memory_space<vmem>>, vector<64x16xf32>
    %c1 = arith.constant 1 : index
    %c0_38 = arith.constant 0 : index
    %c0_39 = arith.constant 0 : index
    %61 = vector.load %arg12[%c1, %c0_38, %c0_39] : memref<9x16x16xf32, #tpu.memory_space<vmem>>, vector<1x16x16xf32>
    %62 = vector.shape_cast %61 : vector<1x16x16xf32> to vector<16x16xf32>
    %cst_40 = arith.constant dense<0.000000e+00> : vector<64x16xf32>
    %63 = tpu.matmul %60, %62, %cst_40 {dimension_numbers = #tpu.dot_dimension_numbers<[1], [0], [0], [1], [0, 0, 1, 1], [], []>} : vector<64x16xf32>, vector<16x16xf32>, vector<64x16xf32> -> vector<64x16xf32>
    %64 = arith.addf %59, %63 : vector<64x16xf32>
    %c9 = arith.constant 9 : index
    %c0_41 = arith.constant 0 : index
    %65 = vector.load %arg15[%c9, %c0_41] : memref<96x16xf32, #tpu.memory_space<vmem>>, vector<64x16xf32>
    %c2 = arith.constant 2 : index
    %c0_42 = arith.constant 0 : index
    %c0_43 = arith.constant 0 : index
    %66 = vector.load %arg12[%c2, %c0_42, %c0_43] : memref<9x16x16xf32, #tpu.memory_space<vmem>>, vector<1x16x16xf32>
    %67 = vector.shape_cast %66 : vector<1x16x16xf32> to vector<16x16xf32>
    %cst_44 = arith.constant dense<0.000000e+00> : vector<64x16xf32>
    %68 = tpu.matmul %65, %67, %cst_44 {dimension_numbers = #tpu.dot_dimension_numbers<[1], [0], [0], [1], [0, 0, 1, 1], [], []>} : vector<64x16xf32>, vector<16x16xf32>, vector<64x16xf32> -> vector<64x16xf32>
    %c7_i32 = arith.constant 7 : i32
    %69 = vector.broadcast %c7_i32 : i32 to vector<64x16xi32>
    %70 = arith.cmpi slt, %49, %69 : vector<64x16xi32>
    %cst_45 = arith.constant 0.000000e+00 : f32
    %71 = vector.broadcast %cst_45 : f32 to vector<64x16xf32>
    %72 = arith.select %70, %68, %71 : vector<64x16xi1>, vector<64x16xf32>
    %73 = arith.addf %64, %72 : vector<64x16xf32>
    %c15 = arith.constant 15 : index
    %c0_46 = arith.constant 0 : index
    %74 = vector.load %arg15[%c15, %c0_46] : memref<96x16xf32, #tpu.memory_space<vmem>>, vector<64x16xf32>
    %c3 = arith.constant 3 : index
    %c0_47 = arith.constant 0 : index
    %c0_48 = arith.constant 0 : index
    %75 = vector.load %arg12[%c3, %c0_47, %c0_48] : memref<9x16x16xf32, #tpu.memory_space<vmem>>, vector<1x16x16xf32>
    %76 = vector.shape_cast %75 : vector<1x16x16xf32> to vector<16x16xf32>
    %cst_49 = arith.constant dense<0.000000e+00> : vector<64x16xf32>
    %77 = tpu.matmul %74, %76, %cst_49 {dimension_numbers = #tpu.dot_dimension_numbers<[1], [0], [0], [1], [0, 0, 1, 1], [], []>} : vector<64x16xf32>, vector<16x16xf32>, vector<64x16xf32> -> vector<64x16xf32>
    %c0_i32_50 = arith.constant 0 : i32
    %78 = vector.broadcast %c0_i32_50 : i32 to vector<64x16xi32>
    %79 = arith.cmpi sgt, %49, %78 : vector<64x16xi32>
    %cst_51 = arith.constant 0.000000e+00 : f32
    %80 = vector.broadcast %cst_51 : f32 to vector<64x16xf32>
    %81 = arith.select %79, %77, %80 : vector<64x16xi1>, vector<64x16xf32>
    %82 = arith.addf %73, %81 : vector<64x16xf32>
    %c16_52 = arith.constant 16 : index
    %c0_53 = arith.constant 0 : index
    %83 = vector.load %arg15[%c16_52, %c0_53] : memref<96x16xf32, #tpu.memory_space<vmem>>, vector<64x16xf32>
    %c4 = arith.constant 4 : index
    %c0_54 = arith.constant 0 : index
    %c0_55 = arith.constant 0 : index
    %84 = vector.load %arg12[%c4, %c0_54, %c0_55] : memref<9x16x16xf32, #tpu.memory_space<vmem>>, vector<1x16x16xf32>
    %85 = vector.shape_cast %84 : vector<1x16x16xf32> to vector<16x16xf32>
    %cst_56 = arith.constant dense<0.000000e+00> : vector<64x16xf32>
    %86 = tpu.matmul %83, %85, %cst_56 {dimension_numbers = #tpu.dot_dimension_numbers<[1], [0], [0], [1], [0, 0, 1, 1], [], []>} : vector<64x16xf32>, vector<16x16xf32>, vector<64x16xf32> -> vector<64x16xf32>
    %87 = arith.addf %82, %86 : vector<64x16xf32>
    %c17 = arith.constant 17 : index
    %c0_57 = arith.constant 0 : index
    %88 = vector.load %arg15[%c17, %c0_57] : memref<96x16xf32, #tpu.memory_space<vmem>>, vector<64x16xf32>
    %c5 = arith.constant 5 : index
    %c0_58 = arith.constant 0 : index
    %c0_59 = arith.constant 0 : index
    %89 = vector.load %arg12[%c5, %c0_58, %c0_59] : memref<9x16x16xf32, #tpu.memory_space<vmem>>, vector<1x16x16xf32>
    %90 = vector.shape_cast %89 : vector<1x16x16xf32> to vector<16x16xf32>
    %cst_60 = arith.constant dense<0.000000e+00> : vector<64x16xf32>
    %91 = tpu.matmul %88, %90, %cst_60 {dimension_numbers = #tpu.dot_dimension_numbers<[1], [0], [0], [1], [0, 0, 1, 1], [], []>} : vector<64x16xf32>, vector<16x16xf32>, vector<64x16xf32> -> vector<64x16xf32>
    %c7_i32_61 = arith.constant 7 : i32
    %92 = vector.broadcast %c7_i32_61 : i32 to vector<64x16xi32>
    %93 = arith.cmpi slt, %49, %92 : vector<64x16xi32>
    %cst_62 = arith.constant 0.000000e+00 : f32
    %94 = vector.broadcast %cst_62 : f32 to vector<64x16xf32>
    %95 = arith.select %93, %91, %94 : vector<64x16xi1>, vector<64x16xf32>
    %96 = arith.addf %87, %95 : vector<64x16xf32>
    %c23 = arith.constant 23 : index
    %c0_63 = arith.constant 0 : index
    %97 = vector.load %arg15[%c23, %c0_63] : memref<96x16xf32, #tpu.memory_space<vmem>>, vector<64x16xf32>
    %c6 = arith.constant 6 : index
    %c0_64 = arith.constant 0 : index
    %c0_65 = arith.constant 0 : index
    %98 = vector.load %arg12[%c6, %c0_64, %c0_65] : memref<9x16x16xf32, #tpu.memory_space<vmem>>, vector<1x16x16xf32>
    %99 = vector.shape_cast %98 : vector<1x16x16xf32> to vector<16x16xf32>
    %cst_66 = arith.constant dense<0.000000e+00> : vector<64x16xf32>
    %100 = tpu.matmul %97, %99, %cst_66 {dimension_numbers = #tpu.dot_dimension_numbers<[1], [0], [0], [1], [0, 0, 1, 1], [], []>} : vector<64x16xf32>, vector<16x16xf32>, vector<64x16xf32> -> vector<64x16xf32>
    %c0_i32_67 = arith.constant 0 : i32
    %101 = vector.broadcast %c0_i32_67 : i32 to vector<64x16xi32>
    %102 = arith.cmpi sgt, %49, %101 : vector<64x16xi32>
    %cst_68 = arith.constant 0.000000e+00 : f32
    %103 = vector.broadcast %cst_68 : f32 to vector<64x16xf32>
    %104 = arith.select %102, %100, %103 : vector<64x16xi1>, vector<64x16xf32>
    %105 = arith.addf %96, %104 : vector<64x16xf32>
    %c24 = arith.constant 24 : index
    %c0_69 = arith.constant 0 : index
    %106 = vector.load %arg15[%c24, %c0_69] : memref<96x16xf32, #tpu.memory_space<vmem>>, vector<64x16xf32>
    %c7_70 = arith.constant 7 : index
    %c0_71 = arith.constant 0 : index
    %c0_72 = arith.constant 0 : index
    %107 = vector.load %arg12[%c7_70, %c0_71, %c0_72] : memref<9x16x16xf32, #tpu.memory_space<vmem>>, vector<1x16x16xf32>
    %108 = vector.shape_cast %107 : vector<1x16x16xf32> to vector<16x16xf32>
    %cst_73 = arith.constant dense<0.000000e+00> : vector<64x16xf32>
    %109 = tpu.matmul %106, %108, %cst_73 {dimension_numbers = #tpu.dot_dimension_numbers<[1], [0], [0], [1], [0, 0, 1, 1], [], []>} : vector<64x16xf32>, vector<16x16xf32>, vector<64x16xf32> -> vector<64x16xf32>
    %110 = arith.addf %105, %109 : vector<64x16xf32>
    %c25 = arith.constant 25 : index
    %c0_74 = arith.constant 0 : index
    %111 = vector.load %arg15[%c25, %c0_74] : memref<96x16xf32, #tpu.memory_space<vmem>>, vector<64x16xf32>
    %c8_75 = arith.constant 8 : index
    %c0_76 = arith.constant 0 : index
    %c0_77 = arith.constant 0 : index
    %112 = vector.load %arg12[%c8_75, %c0_76, %c0_77] : memref<9x16x16xf32, #tpu.memory_space<vmem>>, vector<1x16x16xf32>
    %113 = vector.shape_cast %112 : vector<1x16x16xf32> to vector<16x16xf32>
    %cst_78 = arith.constant dense<0.000000e+00> : vector<64x16xf32>
    %114 = tpu.matmul %111, %113, %cst_78 {dimension_numbers = #tpu.dot_dimension_numbers<[1], [0], [0], [1], [0, 0, 1, 1], [], []>} : vector<64x16xf32>, vector<16x16xf32>, vector<64x16xf32> -> vector<64x16xf32>
    %c7_i32_79 = arith.constant 7 : i32
    %115 = vector.broadcast %c7_i32_79 : i32 to vector<64x16xi32>
    %116 = arith.cmpi slt, %49, %115 : vector<64x16xi32>
    %cst_80 = arith.constant 0.000000e+00 : f32
    %117 = vector.broadcast %cst_80 : f32 to vector<64x16xf32>
    %118 = arith.select %116, %114, %117 : vector<64x16xi1>, vector<64x16xf32>
    %119 = arith.addf %110, %118 : vector<64x16xf32>
    %c0_81 = arith.constant 0 : index
    %c0_82 = arith.constant 0 : index
    %120 = vector.load %arg8[%c0_81, %c0_82] : memref<1x16xf32, #tpu.memory_space<vmem>>, vector<1x16xf32>
    %121 = vector.broadcast %120 : vector<1x16xf32> to vector<64x16xf32>
    %122 = arith.mulf %119, %121 : vector<64x16xf32>
    %c0_83 = arith.constant 0 : index
    %c0_84 = arith.constant 0 : index
    %123 = vector.load %arg9[%c0_83, %c0_84] : memref<1x16xf32, #tpu.memory_space<vmem>>, vector<1x16xf32>
    %124 = vector.broadcast %123 : vector<1x16xf32> to vector<64x16xf32>
    %125 = arith.addf %122, %124 : vector<64x16xf32>
    %cst_85 = arith.constant 0.000000e+00 : f32
    %126 = vector.broadcast %cst_85 : f32 to vector<64x16xf32>
    %127 = arith.maximumf %125, %126 : vector<64x16xf32>
    %c0_86 = arith.constant 0 : index
    %c0_87 = arith.constant 0 : index
    %128 = vector.load %arg13[%c0_86, %c0_87] : memref<16x40xf32, #tpu.memory_space<vmem>>, vector<16x40xf32>
    %cst_88 = arith.constant dense<0.000000e+00> : vector<64x40xf32>
    %129 = tpu.matmul %127, %128, %cst_88 {dimension_numbers = #tpu.dot_dimension_numbers<[1], [0], [0], [1], [0, 0, 1, 1], [], []>} : vector<64x16xf32>, vector<16x40xf32>, vector<64x40xf32> -> vector<64x40xf32>
    %130 = arith.addf %11, %129 : vector<64x40xf32>
    %c0_89 = arith.constant 0 : index
    %c0_90 = arith.constant 0 : index
    %c0_91 = arith.constant 0 : index
    %131 = vector.load %arg14[%c0_89, %c0_90, %c0_91] : memref<1x64x40xf32, #tpu.memory_space<vmem>>, vector<1x64x40xf32>
    %132 = vector.shape_cast %131 : vector<1x64x40xf32> to vector<64x40xf32>
    %133 = vector.shape_cast %130 : vector<64x40xf32> to vector<1x64x40xf32>
    tpu.vector_store %arg14[%c0_89, %c0_90, %c0_91], %133 {strides = array<i32>} : memref<1x64x40xf32, #tpu.memory_space<vmem>>, vector<1x64x40xf32>,
    return
  }
  func.func @transform_0(%arg0: i32) -> (i32, i32, i32) {
    %c0_i32 = arith.constant 0 : i32
    %c0_i32_0 = arith.constant 0 : i32
    %c0_i32_1 = arith.constant 0 : i32
    return %arg0, %c0_i32, %c0_i32_0 : i32, i32, i32
  }
  func.func @transform_1(%arg0: i32) -> (i32, i32) {
    %c0_i32 = arith.constant 0 : i32
    %c0_i32_0 = arith.constant 0 : i32
    %c0_i32_1 = arith.constant 0 : i32
    return %c0_i32, %c0_i32_0 : i32, i32
  }
  func.func @transform_2(%arg0: i32) -> (i32, i32) {
    %c0_i32 = arith.constant 0 : i32
    %c0_i32_0 = arith.constant 0 : i32
    %c0_i32_1 = arith.constant 0 : i32
    return %c0_i32, %c0_i32_0 : i32, i32
  }
  func.func @transform_3(%arg0: i32) -> (i32, i32) {
    %c0_i32 = arith.constant 0 : i32
    %c0_i32_0 = arith.constant 0 : i32
    %c0_i32_1 = arith.constant 0 : i32
    return %c0_i32, %c0_i32_0 : i32, i32
  }
  func.func @transform_4(%arg0: i32) -> (i32, i32) {
    %c0_i32 = arith.constant 0 : i32
    %c0_i32_0 = arith.constant 0 : i32
    %c0_i32_1 = arith.constant 0 : i32
    return %c0_i32, %c0_i32_0 : i32, i32
  }
  func.func @transform_5(%arg0: i32) -> (i32, i32) {
    %c0_i32 = arith.constant 0 : i32
    %c0_i32_0 = arith.constant 0 : i32
    %c0_i32_1 = arith.constant 0 : i32
    return %c0_i32, %c0_i32_0 : i32, i32
  }
  func.func @transform_6(%arg0: i32) -> (i32, i32) {
    %c0_i32 = arith.constant 0 : i32
    %c0_i32_0 = arith.constant 0 : i32
    %c0_i32_1 = arith.constant 0 : i32
    return %c0_i32, %c0_i32_0 : i32, i32
  }
  func.func @transform_7(%arg0: i32) -> (i32, i32) {
    %c0_i32 = arith.constant 0 : i32
    %c0_i32_0 = arith.constant 0 : i32
    %c0_i32_1 = arith.constant 0 : i32
    return %c0_i32, %c0_i32_0 : i32, i32
  }
  func.func @transform_8(%arg0: i32) -> (i32, i32) {
    %c0_i32 = arith.constant 0 : i32
    %c0_i32_0 = arith.constant 0 : i32
    %c0_i32_1 = arith.constant 0 : i32
    return %c0_i32, %c0_i32_0 : i32, i32
  }
  func.func @transform_9(%arg0: i32) -> (i32, i32) {
    %c0_i32 = arith.constant 0 : i32
    %c0_i32_0 = arith.constant 0 : i32
    %c0_i32_1 = arith.constant 0 : i32
    return %c0_i32, %c0_i32_0 : i32, i32
  }
  func.func @transform_10(%arg0: i32) -> (i32, i32) {
    %c0_i32 = arith.constant 0 : i32
    %c0_i32_0 = arith.constant 0 : i32
    %c0_i32_1 = arith.constant 0 : i32
    return %c0_i32, %c0_i32_0 : i32, i32
  }
  func.func @transform_11(%arg0: i32) -> (i32, i32, i32) {
    %c0_i32 = arith.constant 0 : i32
    %c0_i32_0 = arith.constant 0 : i32
    %c0_i32_1 = arith.constant 0 : i32
    %c0_i32_2 = arith.constant 0 : i32
    return %c0_i32, %c0_i32_0, %c0_i32_1 : i32, i32, i32
  }
  func.func @transform_12(%arg0: i32) -> (i32, i32) {
    %c0_i32 = arith.constant 0 : i32
    %c0_i32_0 = arith.constant 0 : i32
    %c0_i32_1 = arith.constant 0 : i32
    return %c0_i32, %c0_i32_0 : i32, i32
  }
  func.func @transform_13(%arg0: i32) -> (i32, i32, i32) {
    %c0_i32 = arith.constant 0 : i32
    %c0_i32_0 = arith.constant 0 : i32
    %c0_i32_1 = arith.constant 0 : i32
    return %arg0, %c0_i32, %c0_i32_0 : i32, i32, i32
  }
}

</mosaic_0001>

<llo_original>
// kernel: _lambda_.1
$region0: #{_lambda_.1}
  #allocation0 [shape = 'u32[]', space=smem, size = 0x4, offset = 0x4, fixed_abs, tag = 'smem constant byte address 0x4 - core index']
  #allocation1 [shape = 'u32[144,128]{1,0:T(1,128)}', space=vmem, size = 0x12000, scoped, tag = 'internal scratch']
  #allocation2 [shape = 'f32[96,16]{1,0:T(8,128)}', space=vmem, size = 0xc000, scoped, tag = 'scratch operand']
  %s0 = inlined_call_operand.vmem [shape: f32[2,64,16], index: 0, kind: input, shape index: {}]
  %s1 = inlined_call_operand.vmem [shape: f32[1,16], index: 1, kind: input, shape index: {}]
  %s2 = inlined_call_operand.vmem [shape: f32[1,16], index: 2, kind: input, shape index: {}]
  %s3 = inlined_call_operand.vmem [shape: f32[1,16], index: 3, kind: input, shape index: {}]
  %s4 = inlined_call_operand.vmem [shape: f32[1,16], index: 4, kind: input, shape index: {}]
  %s5 = inlined_call_operand.vmem [shape: f32[1,16], index: 5, kind: input, shape index: {}]
  %s6 = inlined_call_operand.vmem [shape: f32[1,16], index: 6, kind: input, shape index: {}]
  %s7 = inlined_call_operand.vmem [shape: f32[1,16], index: 7, kind: input, shape index: {}]
  %s8 = inlined_call_operand.vmem [shape: f32[1,16], index: 8, kind: input, shape index: {}]
  %s9 = inlined_call_operand.vmem [shape: f32[16,40], index: 9, kind: input, shape index: {}]
  %s10 = inlined_call_operand.vmem [shape: f32[16,16], index: 10, kind: input, shape index: {}]
  %s11 = inlined_call_operand.vmem [shape: f32[9,16,16], index: 11, kind: input, shape index: {}]
  %s12 = inlined_call_operand.vmem [shape: f32[16,40], index: 12, kind: input, shape index: {}]
  %s13 = inlined_call_operand.vmem [shape: f32[2,64,40], index: 13, kind: output, shape index: {}]
  %s14 = sld [smem:[#allocation0]]
  $region85: #{_lambda_.1} parent=0
    _
  %s16 = ssub.s32 1, %s14
  %s17 = scalar_select 0, %s16, %s14
  loop: start=0, step=1, limit=4
  $region2: #{_lambda_.1} parent=0 // loop_pre_header
    _
  $region3: #{_lambda_.1} parent=0 // loop_header
    %s19 = sphi 0, %s23
    %p20 = scmp.ge.s32.totalorder %s19, 4
    %s29 = sphi 0, %s31
    %s32 = sphi 0, %s29
    %s33 = sphi 0, %s32
    %s49 = sphi 0, %s33
    %s53 = sphi 0, %s53
    %s55 = sphi 0, %s53
    %s56 = sphi 0, %s55
    %s70 = sphi 0, %s56
    %s74 = sphi 0, %s74
    %s76 = sphi 0, %s74
    %s77 = sphi 0, %s76
    %s91 = sphi 0, %s77
    %s95 = sphi 0, %s95
    %s97 = sphi 0, %s95
    %s98 = sphi 0, %s97
    %s112 = sphi 0, %s98
    %s116 = sphi 0, %s116
    %s118 = sphi 0, %s116
    %s119 = sphi 0, %s118
    %s133 = sphi 0, %s119
    %s137 = sphi 0, %s137
    %s139 = sphi 0, %s137
    %s140 = sphi 0, %s139
    %s154 = sphi 0, %s140
    %s158 = sphi 0, %s158
    %s160 = sphi 0, %s158
    %s161 = sphi 0, %s160
    %s175 = sphi 0, %s161
    %s179 = sphi 0, %s179
    %s181 = sphi 0, %s179
    %s182 = sphi 0, %s181
    %s196 = sphi 0, %s182
    %s200 = sphi 0, %s200
    %s202 = sphi 0, %s200
    %s203 = sphi 0, %s202
    %s217 = sphi 0, %s203
    %s221 = sphi 0, %s221
    %s223 = sphi 0, %s221
    %s224 = sphi 0, %s223
    %s238 = sphi 0, %s224
    %s242 = sphi 0, %s242
    %s244 = sphi 0, %s242
    %s245 = sphi 0, %s244
    %s259 = sphi 0, %s245
    %s263 = sphi 0, %s263
    %s265 = sphi 0, %s263
    %s266 = sphi 0, %s265
    %s280 = sphi 0, %s266
    %s284 = sphi 0, %s284
    %s286 = sphi 0, %s284
    %s287 = sphi 0, %s286
    %s301 = sphi 0, %s287
    %s307 = sphi 0, %s309
    %s310 = sphi 0, %s307
    %s311 = sphi 0, %s310
    %s327 = sphi 0, %s311
  $region4: #{_lambda_.1} parent=0 // loop_header_branch
    %22 = sbr.rel (%p20) target = $region8
  $region5: #{_lambda_.1} parent=0 // loop_body
    %s24 = ssub.s32 %s19, 1
    %s25 = ssub.s32 %s19, 2
    %s26 = sadd.s32 %s19, 1
    %s27 = ssub.s32 %s19, %s26
    %p28 = scmp.eq.s32.totalorder %s27, 0
    %s30 = sadd.s32 %s29, 1
    %s31 = scalar_select %p28, %s29, %s30
    %p34 = pneg %p28
    %p35 = scmp.eq.s32.totalorder %s19, 1
    %p36 = por %p34, %p35
    %p37 = scmp.ne.s32.totalorder %s29, %s32
    %p38 = scmp.eq.s32.totalorder %s19, 0
    %p39 = por %p37, %p38
    %p40 = scmp.ne.s32.totalorder %s29, %s32
    %p41 = scmp.eq.s32.totalorder %s24, 1
    %p42 = por %p40, %p41
    %p43 = scmp.ne.s32.totalorder %s32, %s33
    %p44 = scmp.eq.s32.totalorder %s24, 0
    %p45 = por %p43, %p44
    %p46 = scmp.ne.s32.totalorder %s32, %s33
    %p47 = scmp.eq.s32.totalorder %s25, 1
    %p48 = por %p46, %p47
    %p50 = scmp.ne.s32.totalorder %s33, %s49
    %p51 = scmp.eq.s32.totalorder %s25, 0
    %p52 = por %p50, %p51
    %s54 = sadd.s32 %s53, 1
    %p57 = scmp.eq.s32.totalorder %s19, 1
    %p58 = scmp.ne.s32.totalorder %s53, %s55
    %p59 = scmp.eq.s32.totalorder %s19, 0
    %p60 = por %p58, %p59
    %p61 = scmp.ne.s32.totalorder %s53, %s55
    %p62 = scmp.eq.s32.totalorder %s24, 1
    %p63 = por %p61, %p62
    %p64 = scmp.ne.s32.totalorder %s55, %s56
    %p65 = scmp.eq.s32.totalorder %s24, 0
    %p66 = por %p64, %p65
    %p67 = scmp.ne.s32.totalorder %s55, %s56
    %p68 = scmp.eq.s32.totalorder %s25, 1
    %p69 = por %p67, %p68
    %p71 = scmp.ne.s32.totalorder %s56, %s70
    %p72 = scmp.eq.s32.totalorder %s25, 0
    %p73 = por %p71, %p72
    %s75 = sadd.s32 %s74, 1
    %p78 = scmp.eq.s32.totalorder %s19, 1
    %p79 = scmp.ne.s32.totalorder %s74, %s76
    %p80 = scmp.eq.s32.totalorder %s19, 0
    %p81 = por %p79, %p80
    %p82 = scmp.ne.s32.totalorder %s74, %s76
    %p83 = scmp.eq.s32.totalorder %s24, 1
    %p84 = por %p82, %p83
    %p85 = scmp.ne.s32.totalorder %s76, %s77
    %p86 = scmp.eq.s32.totalorder %s24, 0
    %p87 = por %p85, %p86
    %p88 = scmp.ne.s32.totalorder %s76, %s77
    %p89 = scmp.eq.s32.totalorder %s25, 1
    %p90 = por %p88, %p89
    %p92 = scmp.ne.s32.totalorder %s77, %s91
    %p93 = scmp.eq.s32.totalorder %s25, 0
    %p94 = por %p92, %p93
    %s96 = sadd.s32 %s95, 1
    %p99 = scmp.eq.s32.totalorder %s19, 1
    %p100 = scmp.ne.s32.totalorder %s95, %s97
    %p101 = scmp.eq.s32.totalorder %s19, 0
    %p102 = por %p100, %p101
    %p103 = scmp.ne.s32.totalorder %s95, %s97
    %p104 = scmp.eq.s32.totalorder %s24, 1
    %p105 = por %p103, %p104
    %p106 = scmp.ne.s32.totalorder %s97, %s98
    %p107 = scmp.eq.s32.totalorder %s24, 0
    %p108 = por %p106, %p107
    %p109 = scmp.ne.s32.totalorder %s97, %s98
    %p110 = scmp.eq.s32.totalorder %s25, 1
    %p111 = por %p109, %p110
    %p113 = scmp.ne.s32.totalorder %s98, %s112
    %p114 = scmp.eq.s32.totalorder %s25, 0
    %p115 = por %p113, %p114
    %s117 = sadd.s32 %s116, 1
    %p120 = scmp.eq.s32.totalorder %s19, 1
    %p121 = scmp.ne.s32.totalorder %s116, %s118
    %p122 = scmp.eq.s32.totalorder %s19, 0
    %p123 = por %p121, %p122
    %p124 = scmp.ne.s32.totalorder %s116, %s118
    %p125 = scmp.eq.s32.totalorder %s24, 1
    %p126 = por %p124, %p125
    %p127 = scmp.ne.s32.totalorder %s118, %s119
    %p128 = scmp.eq.s32.totalorder %s24, 0
    %p129 = por %p127, %p128
    %p130 = scmp.ne.s32.totalorder %s118, %s119
    %p131 = scmp.eq.s32.totalorder %s25, 1
    %p132 = por %p130, %p131
    %p134 = scmp.ne.s32.totalorder %s119, %s133
    %p135 = scmp.eq.s32.totalorder %s25, 0
    %p136 = por %p134, %p135
    %s138 = sadd.s32 %s137, 1
    %p141 = scmp.eq.s32.totalorder %s19, 1
    %p142 = scmp.ne.s32.totalorder %s137, %s139
    %p143 = scmp.eq.s32.totalorder %s19, 0
    %p144 = por %p142, %p143
    %p145 = scmp.ne.s32.totalorder %s137, %s139
    %p146 = scmp.eq.s32.totalorder %s24, 1
    %p147 = por %p145, %p146
    %p148 = scmp.ne.s32.totalorder %s139, %s140
    %p149 = scmp.eq.s32.totalorder %s24, 0
    %p150 = por %p148, %p149
    %p151 = scmp.ne.s32.totalorder %s139, %s140
    %p152 = scmp.eq.s32.totalorder %s25, 1
    %p153 = por %p151, %p152
    %p155 = scmp.ne.s32.totalorder %s140, %s154
    %p156 = scmp.eq.s32.totalorder %s25, 0
    %p157 = por %p155, %p156
    %s159 = sadd.s32 %s158, 1
    %p162 = scmp.eq.s32.totalorder %s19, 1
    %p163 = scmp.ne.s32.totalorder %s158, %s160
    %p164 = scmp.eq.s32.totalorder %s19, 0
    %p165 = por %p163, %p164
    %p166 = scmp.ne.s32.totalorder %s158, %s160
    %p167 = scmp.eq.s32.totalorder %s24, 1
    %p168 = por %p166, %p167
    %p169 = scmp.ne.s32.totalorder %s160, %s161
    %p170 = scmp.eq.s32.totalorder %s24, 0
    %p171 = por %p169, %p170
    %p172 = scmp.ne.s32.totalorder %s160, %s161
    %p173 = scmp.eq.s32.totalorder %s25, 1
    %p174 = por %p172, %p173
    %p176 = scmp.ne.s32.totalorder %s161, %s175
    %p177 = scmp.eq.s32.totalorder %s25, 0
    %p178 = por %p176, %p177
    %s180 = sadd.s32 %s179, 1
    %p183 = scmp.eq.s32.totalorder %s19, 1
    %p184 = scmp.ne.s32.totalorder %s179, %s181
    %p185 = scmp.eq.s32.totalorder %s19, 0
    %p186 = por %p184, %p185
    %p187 = scmp.ne.s32.totalorder %s179, %s181
    %p188 = scmp.eq.s32.totalorder %s24, 1
    %p189 = por %p187, %p188
    %p190 = scmp.ne.s32.totalorder %s181, %s182
    %p191 = scmp.eq.s32.totalorder %s24, 0
    %p192 = por %p190, %p191
    %p193 = scmp.ne.s32.totalorder %s181, %s182
    %p194 = scmp.eq.s32.totalorder %s25, 1
    %p195 = por %p193, %p194
    %p197 = scmp.ne.s32.totalorder %s182, %s196
    %p198 = scmp.eq.s32.totalorder %s25, 0
    %p199 = por %p197, %p198
    %s201 = sadd.s32 %s200, 1
    %p204 = scmp.eq.s32.totalorder %s19, 1
    %p205 = scmp.ne.s32.totalorder %s200, %s202
    %p206 = scmp.eq.s32.totalorder %s19, 0
    %p207 = por %p205, %p206
    %p208 = scmp.ne.s32.totalorder %s200, %s202
    %p209 = scmp.eq.s32.totalorder %s24, 1
    %p210 = por %p208, %p209
    %p211 = scmp.ne.s32.totalorder %s202, %s203
    %p212 = scmp.eq.s32.totalorder %s24, 0
    %p213 = por %p211, %p212
    %p214 = scmp.ne.s32.totalorder %s202, %s203
    %p215 = scmp.eq.s32.totalorder %s25, 1
    %p216 = por %p214, %p215
    %p218 = scmp.ne.s32.totalorder %s203, %s217
    %p219 = scmp.eq.s32.totalorder %s25, 0
    %p220 = por %p218, %p219
    %s222 = sadd.s32 %s221, 1
    %p225 = scmp.eq.s32.totalorder %s19, 1
    %p226 = scmp.ne.s32.totalorder %s221, %s223
    %p227 = scmp.eq.s32.totalorder %s19, 0
    %p228 = por %p226, %p227
    %p229 = scmp.ne.s32.totalorder %s221, %s223
    %p230 = scmp.eq.s32.totalorder %s24, 1
    %p231 = por %p229, %p230
    %p232 = scmp.ne.s32.totalorder %s223, %s224
    %p233 = scmp.eq.s32.totalorder %s24, 0
    %p234 = por %p232, %p233
    %p235 = scmp.ne.s32.totalorder %s223, %s224
    %p236 = scmp.eq.s32.totalorder %s25, 1
    %p237 = por %p235, %p236
    %p239 = scmp.ne.s32.totalorder %s224, %s238
    %p240 = scmp.eq.s32.totalorder %s25, 0
    %p241 = por %p239, %p240
    %s243 = sadd.s32 %s242, 1
    %p246 = scmp.eq.s32.totalorder %s19, 1
    %p247 = scmp.ne.s32.totalorder %s242, %s244
    %p248 = scmp.eq.s32.totalorder %s19, 0
    %p249 = por %p247, %p248
    %p250 = scmp.ne.s32.totalorder %s242, %s244
    %p251 = scmp.eq.s32.totalorder %s24, 1
    %p252 = por %p250, %p251
    %p253 = scmp.ne.s32.totalorder %s244, %s245
    %p254 = scmp.eq.s32.totalorder %s24, 0
    %p255 = por %p253, %p254
    %p256 = scmp.ne.s32.totalorder %s244, %s245
    %p257 = scmp.eq.s32.totalorder %s25, 1
    %p258 = por %p256, %p257
    %p260 = scmp.ne.s32.totalorder %s245, %s259
    %p261 = scmp.eq.s32.totalorder %s25, 0
    %p262 = por %p260, %p261
    %s264 = sadd.s32 %s263, 1
    %p267 = scmp.eq.s32.totalorder %s19, 1
    %p268 = scmp.ne.s32.totalorder %s263, %s265
    %p269 = scmp.eq.s32.totalorder %s19, 0
    %p270 = por %p268, %p269
    %p271 = scmp.ne.s32.totalorder %s263, %s265
    %p272 = scmp.eq.s32.totalorder %s24, 1
    %p273 = por %p271, %p272
    %p274 = scmp.ne.s32.totalorder %s265, %s266
    %p275 = scmp.eq.s32.totalorder %s24, 0
    %p276 = por %p274, %p275
    %p277 = scmp.ne.s32.totalorder %s265, %s266
    %p278 = scmp.eq.s32.totalorder %s25, 1
    %p279 = por %p277, %p278
    %p281 = scmp.ne.s32.totalorder %s266, %s280
    %p282 = scmp.eq.s32.totalorder %s25, 0
    %p283 = por %p281, %p282
    %s285 = sadd.s32 %s284, 1
    %p288 = scmp.eq.s32.totalorder %s19, 1
    %p289 = scmp.ne.s32.totalorder %s284, %s286
    %p290 = scmp.eq.s32.totalorder %s19, 0
    %p291 = por %p289, %p290
    %p292 = scmp.ne.s32.totalorder %s284, %s286
    %p293 = scmp.eq.s32.totalorder %s24, 1
    %p294 = por %p292, %p293
    %p295 = scmp.ne.s32.totalorder %s286, %s287
    %p296 = scmp.eq.s32.totalorder %s24, 0
    %p297 = por %p295, %p296
    %p298 = scmp.ne.s32.totalorder %s286, %s287
    %p299 = scmp.eq.s32.totalorder %s25, 1
    %p300 = por %p298, %p299
    %p302 = scmp.ne.s32.totalorder %s287, %s301
    %p303 = scmp.eq.s32.totalorder %s25, 0
    %p304 = por %p302, %p303
    %s305 = ssub.s32 %s19, %s26
    %p306 = scmp.eq.s32.totalorder %s305, 0
    %s308 = sadd.s32 %s307, 1
    %s309 = scalar_select %p306, %s307, %s308
    %p312 = pneg %p306
    %p313 = scmp.eq.s32.totalorder %s19, 1
    %p314 = por %p312, %p313
    %p315 = scmp.ne.s32.totalorder %s307, %s310
    %p316 = scmp.eq.s32.totalorder %s19, 0
    %p317 = por %p315, %p316
    %p318 = scmp.ne.s32.totalorder %s307, %s310
    %p319 = scmp.eq.s32.totalorder %s24, 1
    %p320 = por %p318, %p319
    %p321 = scmp.ne.s32.totalorder %s310, %s311
    %p322 = scmp.eq.s32.totalorder %s24, 0
    %p323 = por %p321, %p322
    %p324 = scmp.ne.s32.totalorder %s310, %s311
    %p325 = scmp.eq.s32.totalorder %s25, 1
    %p326 = por %p324, %p325
    %p328 = scmp.ne.s32.totalorder %s311, %s327
    %p329 = scmp.eq.s32.totalorder %s25, 0
    %p330 = por %p328, %p329
    %p331 = scmp.le.s32.totalorder 1, %s19
    %p332 = scmp.lt.s32.totalorder %s19, 3
    %p333 = pnand %p331, %p332
    %p334 = pneg %p333
    // Predicated region
    $region9: #{_lambda_.1} parent=5 // pred_check
      _
    $region10: #{_lambda_.1} parent=5 // pred_check_branch
      %336 = sbr.rel (%p333) target = $region12
    $region11: #{_lambda_.1} parent=5 // pred_region
      %s337 = ssub.s32 %s19, 1
      // Predicated region
      $region13: #{_lambda_.1} parent=11 // pred_check
        %p338 = pneg %p66
      $region14: #{_lambda_.1} parent=11 // pred_check_branch
        %340 = sbr.rel (%p338) target = $region16
      $region15: #{_lambda_.1} parent=11 // pred_region
        _
      $region16: #{_lambda_.1} parent=11 // pred_fallthru
        _
      // Predicated region
      $region17: #{_lambda_.1} parent=11 // pred_check
        %p341 = pneg %p87
      $region18: #{_lambda_.1} parent=11 // pred_check_branch
        %343 = sbr.rel (%p341) target = $region20
      $region19: #{_lambda_.1} parent=11 // pred_region
        _
      $region20: #{_lambda_.1} parent=11 // pred_fallthru
        _
      // Predicated region
      $region21: #{_lambda_.1} parent=11 // pred_check
        %p344 = pneg %p108
      $region22: #{_lambda_.1} parent=11 // pred_check_branch
        %346 = sbr.rel (%p344) target = $region24
      $region23: #{_lambda_.1} parent=11 // pred_region
        _
      $region24: #{_lambda_.1} parent=11 // pred_fallthru
        _
      // Predicated region
      $region25: #{_lambda_.1} parent=11 // pred_check
        %p347 = pneg %p129
      $region26: #{_lambda_.1} parent=11 // pred_check_branch
        %349 = sbr.rel (%p347) target = $region28
      $region27: #{_lambda_.1} parent=11 // pred_region
        _
      $region28: #{_lambda_.1} parent=11 // pred_fallthru
        _
      // Predicated region
      $region29: #{_lambda_.1} parent=11 // pred_check
        %p350 = pneg %p150
      $region30: #{_lambda_.1} parent=11 // pred_check_branch
        %352 = sbr.rel (%p350) target = $region32
      $region31: #{_lambda_.1} parent=11 // pred_region
        _
      $region32: #{_lambda_.1} parent=11 // pred_fallthru
        _
      // Predicated region
      $region33: #{_lambda_.1} parent=11 // pred_check
        %p353 = pneg %p171
      $region34: #{_lambda_.1} parent=11 // pred_check_branch
        %355 = sbr.rel (%p353) target = $region36
      $region35: #{_lambda_.1} parent=11 // pred_region
        _
      $region36: #{_lambda_.1} parent=11 // pred_fallthru
        _
      // Predicated region
      $region37: #{_lambda_.1} parent=11 // pred_check
        %p356 = pneg %p192
      $region38: #{_lambda_.1} parent=11 // pred_check_branch
        %358 = sbr.rel (%p356) target = $region40
      $region39: #{_lambda_.1} parent=11 // pred_region
        _
      $region40: #{_lambda_.1} parent=11 // pred_fallthru
        _
      // Predicated region
      $region41: #{_lambda_.1} parent=11 // pred_check
        %p359 = pneg %p213
      $region42: #{_lambda_.1} parent=11 // pred_check_branch
        %361 = sbr.rel (%p359) target = $region44
      $region43: #{_lambda_.1} parent=11 // pred_region
        _
      $region44: #{_lambda_.1} parent=11 // pred_fallthru
        _
      // Predicated region
      $region45: #{_lambda_.1} parent=11 // pred_check
        %p362 = pneg %p234
      $region46: #{_lambda_.1} parent=11 // pred_check_branch
        %364 = sbr.rel (%p362) target = $region48
      $region47: #{_lambda_.1} parent=11 // pred_region
        _
      $region48: #{_lambda_.1} parent=11 // pred_fallthru
        _
      // Predicated region
      $region49: #{_lambda_.1} parent=11 // pred_check
        %p365 = pneg %p255
      $region50: #{_lambda_.1} parent=11 // pred_check_branch
        %367 = sbr.rel (%p365) target = $region52
      $region51: #{_lambda_.1} parent=11 // pred_region
        _
      $region52: #{_lambda_.1} parent=11 // pred_fallthru
        _
      // Predicated region
      $region53: #{_lambda_.1} parent=11 // pred_check
        %p368 = pneg %p276
      $region54: #{_lambda_.1} parent=11 // pred_check_branch
        %370 = sbr.rel (%p368) target = $region56
      $region55: #{_lambda_.1} parent=11 // pred_region
        _
      $region56: #{_lambda_.1} parent=11 // pred_fallthru
        _
      // Predicated region
      $region57: #{_lambda_.1} parent=11 // pred_check
        %p371 = pneg %p297
      $region58: #{_lambda_.1} parent=11 // pred_check_branch
        %373 = sbr.rel (%p371) target = $region60
      $region59: #{_lambda_.1} parent=11 // pred_region
        _
      $region60: #{_lambda_.1} parent=11 // pred_fallthru
        _
    $region12: #{_lambda_.1} parent=5 // pred_fallthru
      _
    %p374 = scmp.lt.s32.totalorder %s19, 2
    // Predicated region
    $region61: #{_lambda_.1} parent=5 // pred_check
      %p375 = pneg %p374
    $region62: #{_lambda_.1} parent=5 // pred_check_branch
      %377 = sbr.rel (%p375) target = $region64
    $region63: #{_lambda_.1} parent=5 // pred_region
      // Predicated region
      $region65: #{_lambda_.1} parent=63 // pred_check
        %p378 = pneg %p39
      $region66: #{_lambda_.1} parent=63 // pred_check_branch
        %380 = sbr.rel (%p378) target = $region68
      $region67: #{_lambda_.1} parent=63 // pred_region
        %p381 = scmp.lt.s32.totalorder %s19, 1
        %s382 = scalar_select %p381, %s19, 1
        %s383 = smul.addr %s382, 8
        %s384 = smul.addr %s383, 8
        %s385 = scalar_lea.vmem %s0, %s384
      $region68: #{_lambda_.1} parent=63 // pred_fallthru
        _
    $region64: #{_lambda_.1} parent=5 // pred_fallthru
      _
    %p386 = scmp.le.s32.totalorder 1, %s19
    %p387 = scmp.lt.s32.totalorder %s19, 3
    %p388 = pnand %p386, %p387
    %p389 = pneg %p388
    // Predicated region
    $region69: #{_lambda_.1} parent=5 // pred_check
      _
    $region70: #{_lambda_.1} parent=5 // pred_check_branch
      %391 = sbr.rel (%p388) target = $region72
    $region71: #{_lambda_.1} parent=5 // pred_region
      %s392 = ssub.s32 %s19, 1
      %p393 = scmp.lt.s32.totalorder %s24, 1
      %s394 = scalar_select %p393, %s24, 1
      %s395 = smul.addr %s394, 8
      %s396 = smul.addr %s395, 8
      %s397 = scalar_lea.vmem %s0, %s396
      %p398 = pneg %p45
      %p399 = pneg %p42
      %p400 = pneg %p66
      %p401 = pneg %p63
      %p402 = pneg %p87
      %p403 = pneg %p84
      %p404 = pneg %p108
      %p405 = pneg %p105
      %p406 = pneg %p129
      %p407 = pneg %p126
      %p408 = pneg %p150
      %p409 = pneg %p147
      %p410 = pneg %p171
      %p411 = pneg %p168
      %p412 = pneg %p192
      %p413 = pneg %p189
      %p414 = pneg %p213
      %p415 = pneg %p210
      %p416 = pneg %p234
      %p417 = pneg %p231
      %p418 = pneg %p255
      %p419 = pneg %p252
      %p420 = pneg %p276
      %p421 = pneg %p273
      %p422 = pneg %p297
      %p423 = pneg %p294
      %p424 = pneg %p323
      %p425 = pneg %p320
      %p426 = scmp.lt.s32.totalorder %s24, 1
      %s427 = scalar_select %p426, %s24, 1
      %s428 = smul.addr %s427, 8
      %s429 = smul.addr %s428, 8
      %s430 = scalar_lea.vmem %s13, %s429
      %p431 = scmp.lt.s32.totalorder %s24, 1
      %s432 = scalar_select %p431, %s24, 1
      %s433 = smul.addr %s432, 8
      %s434 = smul.addr %s433, 8
      %s435 = scalar_lea.vmem %s0, %s434
      %p436 = scmp.lt.s32.totalorder %s24, 1
      %s437 = scalar_select %p436, %s24, 1
      %s438 = smul.addr %s437, 8
      %s439 = smul.addr %s438, 8
      %s440 = scalar_lea.vmem %s13, %s439
      %v441 = vld [vmem:[%s435] sm:$0xff]
      %v442 = vld [vmem:[%s435 + $0x8] sm:$0xff]
      %v443 = vld [vmem:[%s435 + $0x10] sm:$0xff]
      %v444 = vld [vmem:[%s435 + $0x18] sm:$0xff]
      %v445 = vld [vmem:[%s435 + $0x20] sm:$0xff]
      %v446 = vld [vmem:[%s435 + $0x28] sm:$0xff]
      %v447 = vld [vmem:[%s435 + $0x30] sm:$0xff]
      %v448 = vld [vmem:[%s435 + $0x38] sm:$0xff]
      %v449 = vld [vmem:[%s1] sm:$0x1]
      %v451 = vlaneseq
      %v452 = vshrl.u32 %v451, 7
      %v453 = vsub.s32 0, %v452
      %v454 = vrot.slane %v449, %v453
      %v456 = vmul.f32 %v441, %v454
      %v457 = vmul.f32 %v442, %v454
      %v458 = vmul.f32 %v443, %v454
      %v459 = vmul.f32 %v444, %v454
      %v460 = vmul.f32 %v445, %v454
      %v461 = vmul.f32 %v446, %v454
      %v462 = vmul.f32 %v447, %v454
      %v463 = vmul.f32 %v448, %v454
      %v464 = vld [vmem:[%s2] sm:$0x1]
      %v466 = vlaneseq
      %v467 = vshrl.u32 %v466, 7
      %v468 = vsub.s32 0, %v467
      %v469 = vrot.slane %v464, %v468
      %v471 = vadd.f32 %v456, %v469
      %v472 = vadd.f32 %v457, %v469
      %v473 = vadd.f32 %v458, %v469
      %v474 = vadd.f32 %v459, %v469
      %v475 = vadd.f32 %v460, %v469
      %v476 = vadd.f32 %v461, %v469
      %v477 = vadd.f32 %v462, %v469
      %v478 = vadd.f32 %v463, %v469
      %v479 = vmax.f32 %v471, 0.0
      %v480 = vmax.f32 %v472, 0.0
      %v481 = vmax.f32 %v473, 0.0
      %v482 = vmax.f32 %v474, 0.0
      %v483 = vmax.f32 %v475, 0.0
      %v484 = vmax.f32 %v476, 0.0
      %v485 = vmax.f32 %v477, 0.0
      %v486 = vmax.f32 %v478, 0.0
      %v487 = vld [vmem:[%s9] sm:$0xff]
      %v488 = vld [vmem:[%s9 + $0x8] sm:$0xff]
      %v489 = vld [vmem:[%s3] sm:$0x1]
      %v491 = vlaneseq
      %v492 = vshrl.u32 %v491, 7
      %v493 = vsub.s32 0, %v492
      %v494 = vrot.slane %v489, %v493
      %v496 = vmul.f32 %v441, %v494
      %v497 = vmul.f32 %v442, %v494
      %v498 = vmul.f32 %v443, %v494
      %v499 = vmul.f32 %v444, %v494
      %v500 = vmul.f32 %v445, %v494
      %v501 = vmul.f32 %v446, %v494
      %v502 = vmul.f32 %v447, %v494
      %v503 = vmul.f32 %v448, %v494
      %v504 = vld [vmem:[%s4] sm:$0x1]
      %v506 = vlaneseq
      %v507 = vshrl.u32 %v506, 7
      %v508 = vsub.s32 0, %v507
      %v509 = vrot.slane %v504, %v508
      %v511 = vadd.f32 %v496, %v509
      %v512 = vadd.f32 %v497, %v509
      %v513 = vadd.f32 %v498, %v509
      %v514 = vadd.f32 %v499, %v509
      %v515 = vadd.f32 %v500, %v509
      %v516 = vadd.f32 %v501, %v509
      %v517 = vadd.f32 %v502, %v509
      %v518 = vadd.f32 %v503, %v509
      %v519 = vmax.f32 %v511, 0.0
      %v520 = vmax.f32 %v512, 0.0
      %v521 = vmax.f32 %v513, 0.0
      %v522 = vmax.f32 %v514, 0.0
      %v523 = vmax.f32 %v515, 0.0
      %v524 = vmax.f32 %v516, 0.0
      %v525 = vmax.f32 %v517, 0.0
      %v526 = vmax.f32 %v518, 0.0
      %v527 = vld [vmem:[%s10] sm:$0xff]
      %v528 = vld [vmem:[%s10 + $0x8] sm:$0xff]
      %vm529 = vcmask 130048
      %v531 = vsel %vm529, %v519, 0
      %v534 = vsel %vm529, %v520, 0
      %v537 = vsel %vm529, %v521, 0
      %v540 = vsel %vm529, %v522, 0
      %v543 = vsel %vm529, %v523, 0
      %v546 = vsel %vm529, %v524, 0
      %v549 = vsel %vm529, %v525, 0
      %v552 = vsel %vm529, %v526, 0
      %554 = vmatprep.subr.mxu0 0.0
      %555 = vmatpush1.msra.mxu0 %v527
      %556 = vmatprep.subr.mxu0 0.0
      %557 = vmatpush1.msra.mxu0 %v528
      %558 = vmatprep.subr.mxu0 0.0
      %559 = vmatpush1.msra.mxu0 0.0
      %560 = vmatprep.subr.mxu0 0.0
      %561 = vmatpush1.msra.mxu0 0.0
      %562 = vmatprep.subr.mxu0 0.0
      %563 = vmatpush1.msra.mxu0 0.0
      %564 = vmatprep.subr.mxu0 0.0
      %565 = vmatpush1.msra.mxu0 0.0
      %566 = vmatprep.subr.mxu0 0.0
      %567 = vmatpush1.msra.mxu0 0.0
      %568 = vmatprep.subr.mxu0 0.0
      %569 = vmatpush1.msra.mxu0 0.0
      %570 = vmatprep.subr.mxu0 0.0
      %571 = vmatpush1.msra.mxu0 0.0
      %572 = vmatprep.subr.mxu0 0.0
      %573 = vmatpush1.msra.mxu0 0.0
      %574 = vmatprep.subr.mxu0 0.0
      %575 = vmatpush1.msra.mxu0 0.0
      %576 = vmatprep.subr.mxu0 0.0
      %577 = vmatpush1.msra.mxu0 0.0
      %578 = vmatprep.subr.mxu0 0.0
      %579 = vmatpush1.msra.mxu0 0.0
      %580 = vmatprep.subr.mxu0 0.0
      %581 = vmatpush1.msra.mxu0 0.0
      %582 = vmatprep.subr.mxu0 0.0
      %583 = vmatpush1.msra.mxu0 0.0
      %584 = vmatprep.subr.mxu0 0.0
      %585 = vmatpush1.msra.mxu0 0.0
      %586 = vmatprep.subr.mxu0 0.0
      %587 = vmatpush1.msra.mxu0 0.0
      %588 = vmatprep.subr.mxu0 0.0
      %589 = vmatpush1.msra.mxu0 0.0
      %590 = vmatprep.subr.mxu0 0.0
      %591 = vmatpush1.msra.mxu0 0.0
      %592 = vmatprep.subr.mxu0 0.0
      %593 = vmatpush1.msra.mxu0 0.0
      %594 = vmatprep.subr.mxu0 0.0
      %595 = vmatpush1.msra.mxu0 0.0
      %596 = vmatprep.subr.mxu0 0.0
      %597 = vmatpush1.msra.mxu0 0.0
      %598 = vmatprep.subr.mxu0 0.0
      %599 = vmatpush1.msra.mxu0 0.0
      %600 = vmatprep.subr.mxu0 0.0
      %601 = vmatpush1.msra.mxu0 0.0
      %602 = vmatprep.subr.mxu0 0.0
      %603 = vmatpush1.msra.mxu0 0.0
      %604 = vmatprep.subr.mxu0 0.0
      %605 = vmatpush1.msra.mxu0 0.0
      %606 = vmatprep.subr.mxu0 0.0
      %607 = vmatpush1.msra.mxu0 0.0
      %608 = vmatprep.subr.mxu0 0.0
      %609 = vmatpush1.msra.mxu0 0.0
      %610 = vmatprep.subr.mxu0 0.0
      %611 = vmatpush1.msra.mxu0 0.0
      %612 = vmatprep.subr.mxu0 0.0
      %613 = vmatpush1.msra.mxu0 0.0
      %614 = vmatprep.subr.mxu0 0.0
      %615 = vmatpush1.msra.mxu0 0.0
      %616 = vmatprep.subr.mxu0 0.0
      %617 = vmatpush1.msra.mxu0 0.0
      %618 = vmatprep.mubr.f32.mxu0 0.0
      %619 = vmatmul.mubr.f32.gmra.mrb[0].mxu0 %v531
      %v620 = vpop.f32.mrb[0].mxu0
      %v621 = vadd.f32 0.0, %v620
      %v622 = vpop.f32.mrb[0].mxu0
      %623 = vmatprep.mubr.f32.mxu0 0.0
      %624 = vmatmul.mubr.f32.gmra.mrb[0].mxu0 %v534
      %v625 = vpop.f32.mrb[0].mxu0
      %v626 = vadd.f32 0.0, %v625
      %v627 = vpop.f32.mrb[0].mxu0
      %628 = vmatprep.mubr.f32.mxu0 0.0
      %629 = vmatmul.mubr.f32.gmra.mrb[0].mxu0 %v537
      %v630 = vpop.f32.mrb[0].mxu0
      %v631 = vadd.f32 0.0, %v630
      %v632 = vpop.f32.mrb[0].mxu0
      %633 = vmatprep.mubr.f32.mxu0 0.0
      %634 = vmatmul.mubr.f32.gmra.mrb[0].mxu0 %v540
      %v635 = vpop.f32.mrb[0].mxu0
      %v636 = vadd.f32 0.0, %v635
      %v637 = vpop.f32.mrb[0].mxu0
      %638 = vmatprep.mubr.f32.mxu0 0.0
      %639 = vmatmul.mubr.f32.gmra.mrb[0].mxu0 %v543
      %v640 = vpop.f32.mrb[0].mxu0
      %v641 = vadd.f32 0.0, %v640
      %v642 = vpop.f32.mrb[0].mxu0
      %643 = vmatprep.mubr.f32.mxu0 0.0
      %644 = vmatmul.mubr.f32.gmra.mrb[0].mxu0 %v546
      %v645 = vpop.f32.mrb[0].mxu0
      %v646 = vadd.f32 0.0, %v645
      %v647 = vpop.f32.mrb[0].mxu0
      %648 = vmatprep.mubr.f32.mxu0 0.0
      %649 = vmatmul.mubr.f32.gmra.mrb[0].mxu0 %v549
      %v650 = vpop.f32.mrb[0].mxu0
      %v651 = vadd.f32 0.0, %v650
      %v652 = vpop.f32.mrb[0].mxu0
      %653 = vmatprep.mubr.f32.mxu0 0.0
      %654 = vmatmul.mubr.f32.gmra.mrb[0].mxu0 %v552
      %v655 = vpop.f32.mrb[0].mxu0
      %v656 = vadd.f32 0.0, %v655
      %v657 = vpop.f32.mrb[0].mxu0
      %658 = vdwg.mxu0
      %v659 = vld [vmem:[%s5] sm:$0x1]
      %v661 = vlaneseq
      %v662 = vshrl.u32 %v661, 7
      %v663 = vsub.s32 0, %v662
      %v664 = vrot.slane %v659, %v663
      %v666 = vmul.f32 %v621, %v664
      %v667 = vmul.f32 %v626, %v664
      %v668 = vmul.f32 %v631, %v664
      %v669 = vmul.f32 %v636, %v664
      %v670 = vmul.f32 %v641, %v664
      %v671 = vmul.f32 %v646, %v664
      %v672 = vmul.f32 %v651, %v664
      %v673 = vmul.f32 %v656, %v664
      %v674 = vld [vmem:[%s6] sm:$0x1]
      %v676 = vlaneseq
      %v677 = vshrl.u32 %v676, 7
      %v678 = vsub.s32 0, %v677
      %v679 = vrot.slane %v674, %v678
      %v681 = vadd.f32 %v666, %v679
      %v682 = vadd.f32 %v667, %v679
      %v683 = vadd.f32 %v668, %v679
      %v684 = vadd.f32 %v669, %v679
      %v685 = vadd.f32 %v670, %v679
      %v686 = vadd.f32 %v671, %v679
      %v687 = vadd.f32 %v672, %v679
      %v688 = vadd.f32 %v673, %v679
      %v689 = vmax.f32 %v681, 0.0
      %v690 = vmax.f32 %v682, 0.0
      %v691 = vmax.f32 %v683, 0.0
      %v692 = vmax.f32 %v684, 0.0
      %v693 = vmax.f32 %v685, 0.0
      %v694 = vmax.f32 %v686, 0.0
      %v695 = vmax.f32 %v687, 0.0
      %v696 = vmax.f32 %v688, 0.0
      %697 = vst.msk [vmem:[#allocation2] sm:$0xff] %vm529, 0.0
      %698 = vst.msk [vmem:[#allocation2 + $0x8] sm:$0xff] %vm529, 0.0
      %699 = vst.msk [vmem:[#allocation2 + $0x10] sm:$0xff] %vm529, 0.0
      %700 = vst.msk [vmem:[#allocation2 + $0x18] sm:$0xff] %vm529, 0.0
      %701 = vst.msk [vmem:[#allocation2 + $0x20] sm:$0xff] %vm529, 0.0
      %702 = vst.msk [vmem:[#allocation2 + $0x28] sm:$0xff] %vm529, 0.0
      %703 = vst.msk [vmem:[#allocation2 + $0x30] sm:$0xff] %vm529, 0.0
      %704 = vst.msk [vmem:[#allocation2 + $0x38] sm:$0xff] %vm529, 0.0
      %705 = vst.msk [vmem:[#allocation2 + $0x40] sm:$0xff] %vm529, 0.0
      %706 = vst.msk [vmem:[#allocation2 + $0x48] sm:$0xff] %vm529, 0.0
      %707 = vst.msk [vmem:[#allocation2 + $0x50] sm:$0xff] %vm529, 0.0
      %708 = vst.msk [vmem:[#allocation2 + $0x58] sm:$0xff] %vm529, 0.0
      %709 = vst.msk [vmem:[#allocation2 + $0x10] sm:$0xff] %vm529, %v689
      %710 = vst.msk [vmem:[#allocation2 + $0x18] sm:$0xff] %vm529, %v690
      %711 = vst.msk [vmem:[#allocation2 + $0x20] sm:$0xff] %vm529, %v691
      %712 = vst.msk [vmem:[#allocation2 + $0x28] sm:$0xff] %vm529, %v692
      %713 = vst.msk [vmem:[#allocation2 + $0x30] sm:$0xff] %vm529, %v693
      %714 = vst.msk [vmem:[#allocation2 + $0x38] sm:$0xff] %vm529, %v694
      %715 = vst.msk [vmem:[#allocation2 + $0x40] sm:$0xff] %vm529, %v695
      %716 = vst.msk [vmem:[#allocation2 + $0x48] sm:$0xff] %vm529, %v696
      %v717 = vlaneseq
      %v718 = vshrl.u32 %v717, 7
      %v719 = vadd.s32 %v718, 8
      %v720 = vadd.s32 %v718, 16
      %v721 = vadd.s32 %v718, 24
      %v722 = vadd.s32 %v718, 32
      %v723 = vadd.s32 %v718, 40
      %v724 = vadd.s32 %v718, 48
      %v725 = vadd.s32 %v718, 56
      %vm726 = vcmp.lt.s32.totalorder %v718, 0
      %v727 = vsub.s32 0, %v718
      %v728 = vsel %vm726, %v727, %v718
      %v729 = vshrl.u32 %v728, 3
      %v730 = vand.u32 %v728, 7
      %v731 = vsub.s32 0, %v730
      %v732 = vsel %vm726, %v731, %v730
      %vm733 = vcmp.lt.s32.totalorder %v719, 0
      %v734 = vsub.s32 0, %v719
      %v735 = vsel %vm733, %v734, %v719
      %v736 = vshrl.u32 %v735, 3
      %v737 = vand.u32 %v735, 7
      %v738 = vsub.s32 0, %v737
      %v739 = vsel %vm733, %v738, %v737
      %vm740 = vcmp.lt.s32.totalorder %v720, 0
      %v741 = vsub.s32 0, %v720
      %v742 = vsel %vm740, %v741, %v720
      %v743 = vshrl.u32 %v742, 3
      %v744 = vand.u32 %v742, 7
      %v745 = vsub.s32 0, %v744
      %v746 = vsel %vm740, %v745, %v744
      %vm747 = vcmp.lt.s32.totalorder %v721, 0
      %v748 = vsub.s32 0, %v721
      %v749 = vsel %vm747, %v748, %v721
      %v750 = vshrl.u32 %v749, 3
      %v751 = vand.u32 %v749, 7
      %v752 = vsub.s32 0, %v751
      %v753 = vsel %vm747, %v752, %v751
      %vm754 = vcmp.lt.s32.totalorder %v722, 0
      %v755 = vsub.s32 0, %v722
      %v756 = vsel %vm754, %v755, %v722
      %v757 = vshrl.u32 %v756, 3
      %v758 = vand.u32 %v756, 7
      %v759 = vsub.s32 0, %v758
      %v760 = vsel %vm754, %v759, %v758
      %vm761 = vcmp.lt.s32.totalorder %v723, 0
      %v762 = vsub.s32 0, %v723
      %v763 = vsel %vm761, %v762, %v723
      %v764 = vshrl.u32 %v763, 3
      %v765 = vand.u32 %v763, 7
      %v766 = vsub.s32 0, %v765
      %v767 = vsel %vm761, %v766, %v765
      %vm768 = vcmp.lt.s32.totalorder %v724, 0
      %v769 = vsub.s32 0, %v724
      %v770 = vsel %vm768, %v769, %v724
      %v771 = vshrl.u32 %v770, 3
      %v772 = vand.u32 %v770, 7
      %v773 = vsub.s32 0, %v772
      %v774 = vsel %vm768, %v773, %v772
      %vm775 = vcmp.lt.s32.totalorder %v725, 0
      %v776 = vsub.s32 0, %v725
      %v777 = vsel %vm775, %v776, %v725
      %v778 = vshrl.u32 %v777, 3
      %v779 = vand.u32 %v777, 7
      %v780 = vsub.s32 0, %v779
      %v781 = vsel %vm775, %v780, %v779
      %vm782 = vcmp.ne.s32.totalorder %v732, 0
      %vm783 = vcmp.ne.s32.totalorder %v739, 0
      %vm784 = vcmp.ne.s32.totalorder %v746, 0
      %vm785 = vcmp.ne.s32.totalorder %v753, 0
      %vm786 = vcmp.ne.s32.totalorder %v760, 0
      %vm787 = vcmp.ne.s32.totalorder %v767, 0
      %vm788 = vcmp.ne.s32.totalorder %v774, 0
      %vm789 = vcmp.ne.s32.totalorder %v781, 0
      %vm790 = vcmp.lt.s32.totalorder %v732, 0
      %vm791 = vcmp.lt.s32.totalorder %v739, 0
      %vm792 = vcmp.lt.s32.totalorder %v746, 0
      %vm793 = vcmp.lt.s32.totalorder %v753, 0
      %vm794 = vcmp.lt.s32.totalorder %v760, 0
      %vm795 = vcmp.lt.s32.totalorder %v767, 0
      %vm796 = vcmp.lt.s32.totalorder %v774, 0
      %vm797 = vcmp.lt.s32.totalorder %v781, 0
      %vm798 = vmand %vm790, %vm782
      %vm799 = vmand %vm791, %vm783
      %vm800 = vmand %vm792, %vm784
      %vm801 = vmand %vm793, %vm785
      %vm802 = vmand %vm794, %vm786
      %vm803 = vmand %vm795, %vm787
      %vm804 = vmand %vm796, %vm788
      %vm805 = vmand %vm797, %vm789
      %v806 = vadd.s32 %v732, 8
      %v807 = vadd.s32 %v739, 8
      %v808 = vadd.s32 %v746, 8
      %v809 = vadd.s32 %v753, 8
      %v810 = vadd.s32 %v760, 8
      %v811 = vadd.s32 %v767, 8
      %v812 = vadd.s32 %v774, 8
      %v813 = vadd.s32 %v781, 8
      %v814 = vsel %vm798, %v806, %v732
      %v815 = vsel %vm799, %v807, %v739
      %v816 = vsel %vm800, %v808, %v746
      %v817 = vsel %vm801, %v809, %v753
      %v818 = vsel %vm802, %v810, %v760
      %v819 = vsel %vm803, %v811, %v767
      %v820 = vsel %vm804, %v812, %v774
      %v821 = vsel %vm805, %v813, %v781
      %v822 = vld [vmem:[#allocation2 + $0x7] sm:$0xff]
      %v823 = vld [vmem:[#allocation2 + $0xf] sm:$0xff]
      %v824 = vld [vmem:[#allocation2 + $0x17] sm:$0xff]
      %v825 = vld [vmem:[#allocation2 + $0x1f] sm:$0xff]
      %v826 = vld [vmem:[#allocation2 + $0x27] sm:$0xff]
      %v827 = vld [vmem:[#allocation2 + $0x2f] sm:$0xff]
      %v828 = vld [vmem:[#allocation2 + $0x37] sm:$0xff]
      %v829 = vld [vmem:[#allocation2 + $0x3f] sm:$0xff]
      %v830 = vld [vmem:[%s11] sm:$0xff]
      %v831 = vld [vmem:[%s11 + $0x8] sm:$0xff]
      %v833 = vsel %vm529, %v822, 0
      %v836 = vsel %vm529, %v823, 0
      %v839 = vsel %vm529, %v824, 0
      %v842 = vsel %vm529, %v825, 0
      %v845 = vsel %vm529, %v826, 0
      %v848 = vsel %vm529, %v827, 0
      %v851 = vsel %vm529, %v828, 0
      %v854 = vsel %vm529, %v829, 0
      %856 = vmatprep.subr.mxu0 0.0
      %857 = vmatpush1.msra.mxu0 %v830
      %858 = vmatprep.subr.mxu0 0.0
      %859 = vmatpush1.msra.mxu0 %v831
      %860 = vmatprep.subr.mxu0 0.0
      %861 = vmatpush1.msra.mxu0 0.0
      %862 = vmatprep.subr.mxu0 0.0
      %863 = vmatpush1.msra.mxu0 0.0
      %864 = vmatprep.subr.mxu0 0.0
      %865 = vmatpush1.msra.mxu0 0.0
      %866 = vmatprep.subr.mxu0 0.0
      %867 = vmatpush1.msra.mxu0 0.0
      %868 = vmatprep.subr.mxu0 0.0
      %869 = vmatpush1.msra.mxu0 0.0
      %870 = vmatprep.subr.mxu0 0.0
      %871 = vmatpush1.msra.mxu0 0.0
      %872 = vmatprep.subr.mxu0 0.0
      %873 = vmatpush1.msra.mxu0 0.0
      %874 = vmatprep.subr.mxu0 0.0
      %875 = vmatpush1.msra.mxu0 0.0
      %876 = vmatprep.subr.mxu0 0.0
      %877 = vmatpush1.msra.mxu0 0.0
      %878 = vmatprep.subr.mxu0 0.0
      %879 = vmatpush1.msra.mxu0 0.0
      %880 = vmatprep.subr.mxu0 0.0
      %881 = vmatpush1.msra.mxu0 0.0
      %882 = vmatprep.subr.mxu0 0.0
      %883 = vmatpush1.msra.mxu0 0.0
      %884 = vmatprep.subr.mxu0 0.0
      %885 = vmatpush1.msra.mxu0 0.0
      %886 = vmatprep.subr.mxu0 0.0
      %887 = vmatpush1.msra.mxu0 0.0
      %888 = vmatprep.subr.mxu0 0.0
      %889 = vmatpush1.msra.mxu0 0.0
      %890 = vmatprep.subr.mxu0 0.0
      %891 = vmatpush1.msra.mxu0 0.0
      %892 = vmatprep.subr.mxu0 0.0
      %893 = vmatpush1.msra.mxu0 0.0
      %894 = vmatprep.subr.mxu0 0.0
      %895 = vmatpush1.msra.mxu0 0.0
      %896 = vmatprep.subr.mxu0 0.0
      %897 = vmatpush1.msra.mxu0 0.0
      %898 = vmatprep.subr.mxu0 0.0
      %899 = vmatpush1.msra.mxu0 0.0
      %900 = vmatprep.subr.mxu0 0.0
      %901 = vmatpush1.msra.mxu0 0.0
      %902 = vmatprep.subr.mxu0 0.0
      %903 = vmatpush1.msra.mxu0 0.0
      %904 = vmatprep.subr.mxu0 0.0
      %905 = vmatpush1.msra.mxu0 0.0
      %906 = vmatprep.subr.mxu0 0.0
      %907 = vmatpush1.msra.mxu0 0.0
      %908 = vmatprep.subr.mxu0 0.0
      %909 = vmatpush1.msra.mxu0 0.0
      %910 = vmatprep.subr.mxu0 0.0
      %911 = vmatpush1.msra.mxu0 0.0
      %912 = vmatprep.subr.mxu0 0.0
      %913 = vmatpush1.msra.mxu0 0.0
      %914 = vmatprep.subr.mxu0 0.0
      %915 = vmatpush1.msra.mxu0 0.0
      %916 = vmatprep.subr.mxu0 0.0
      %917 = vmatpush1.msra.mxu0 0.0
      %918 = vmatprep.subr.mxu0 0.0
      %919 = vmatpush1.msra.mxu0 0.0
      %920 = vmatprep.mubr.f32.mxu0 0.0
      %921 = vmatmul.mubr.f32.gmra.mrb[0].mxu0 %v833
      %v922 = vpop.f32.mrb[0].mxu0
      %v923 = vadd.f32 0.0, %v922
      %v924 = vpop.f32.mrb[0].mxu0
      %925 = vmatprep.mubr.f32.mxu0 0.0
      %926 = vmatmul.mubr.f32.gmra.mrb[0].mxu0 %v836
      %v927 = vpop.f32.mrb[0].mxu0
      %v928 = vadd.f32 0.0, %v927
      %v929 = vpop.f32.mrb[0].mxu0
      %930 = vmatprep.mubr.f32.mxu0 0.0
      %931 = vmatmul.mubr.f32.gmra.mrb[0].mxu0 %v839
      %v932 = vpop.f32.mrb[0].mxu0
      %v933 = vadd.f32 0.0, %v932
      %v934 = vpop.f32.mrb[0].mxu0
      %935 = vmatprep.mubr.f32.mxu0 0.0
      %936 = vmatmul.mubr.f32.gmra.mrb[0].mxu0 %v842
      %v937 = vpop.f32.mrb[0].mxu0
      %v938 = vadd.f32 0.0, %v937
      %v939 = vpop.f32.mrb[0].mxu0
      %940 = vmatprep.mubr.f32.mxu0 0.0
      %941 = vmatmul.mubr.f32.gmra.mrb[0].mxu0 %v845
      %v942 = vpop.f32.mrb[0].mxu0
      %v943 = vadd.f32 0.0, %v942
      %v944 = vpop.f32.mrb[0].mxu0
      %945 = vmatprep.mubr.f32.mxu0 0.0
      %946 = vmatmul.mubr.f32.gmra.mrb[0].mxu0 %v848
      %v947 = vpop.f32.mrb[0].mxu0
      %v948 = vadd.f32 0.0, %v947
      %v949 = vpop.f32.mrb[0].mxu0
      %950 = vmatprep.mubr.f32.mxu0 0.0
      %951 = vmatmul.mubr.f32.gmra.mrb[0].mxu0 %v851
      %v952 = vpop.f32.mrb[0].mxu0
      %v953 = vadd.f32 0.0, %v952
      %v954 = vpop.f32.mrb[0].mxu0
      %955 = vmatprep.mubr.f32.mxu0 0.0
      %956 = vmatmul.mubr.f32.gmra.mrb[0].mxu0 %v854
      %v957 = vpop.f32.mrb[0].mxu0
      %v958 = vadd.f32 0.0, %v957
      %v959 = vpop.f32.mrb[0].mxu0
      %960 = vdwg.mxu0
      %vm961 = vcmp.gt.s32.totalorder %v814, 0
      %vm962 = vcmp.gt.s32.totalorder %v815, 0
      %vm963 = vcmp.gt.s32.totalorder %v816, 0
      %vm964 = vcmp.gt.s32.totalorder %v817, 0
      %vm965 = vcmp.gt.s32.totalorder %v818, 0
      %vm966 = vcmp.gt.s32.totalorder %v819, 0
      %vm967 = vcmp.gt.s32.totalorder %v820, 0
      %vm968 = vcmp.gt.s32.totalorder %v821, 0
      %v969 = vsel %vm961, %v923, 0.0
      %v970 = vsel %vm962, %v928, 0.0
      %v971 = vsel %vm963, %v933, 0.0
      %v972 = vsel %vm964, %v938, 0.0
      %v973 = vsel %vm965, %v943, 0.0
      %v974 = vsel %vm966, %v948, 0.0
      %v975 = vsel %vm967, %v953, 0.0
      %v976 = vsel %vm968, %v958, 0.0
      %v977 = vadd.f32 %v969, 0.0
      %v978 = vadd.f32 %v970, 0.0
      %v979 = vadd.f32 %v971, 0.0
      %v980 = vadd.f32 %v972, 0.0
      %v981 = vadd.f32 %v973, 0.0
      %v982 = vadd.f32 %v974, 0.0
      %v983 = vadd.f32 %v975, 0.0
      %v984 = vadd.f32 %v976, 0.0
      %v985 = vld [vmem:[#allocation2 + $0x8] sm:$0xff]
      %v986 = vld [vmem:[#allocation2 + $0x10] sm:$0xff]
      %v987 = vld [vmem:[#allocation2 + $0x18] sm:$0xff]
      %v988 = vld [vmem:[#allocation2 + $0x20] sm:$0xff]
      %v989 = vld [vmem:[#allocation2 + $0x28] sm:$0xff]
      %v990 = vld [vmem:[#allocation2 + $0x30] sm:$0xff]
      %v991 = vld [vmem:[#allocation2 + $0x38] sm:$0xff]
      %v992 = vld [vmem:[#allocation2 + $0x40] sm:$0xff]
      %s993 = scalar_lea.vmem %s11, 16
      %v994 = vld [vmem:[%s993] sm:$0xff]
      %v995 = vld [vmem:[%s993 + $0x8] sm:$0xff]
      %v997 = vsel %vm529, %v985, 0
      %v1000 = vsel %vm529, %v986, 0
      %v1003 = vsel %vm529, %v987, 0
      %v1006 = vsel %vm529, %v988, 0
      %v1009 = vsel %vm529, %v989, 0
      %v1012 = vsel %vm529, %v990, 0
      %v1015 = vsel %vm529, %v991, 0
      %v1018 = vsel %vm529, %v992, 0
      %1020 = vmatprep.subr.mxu0 0.0
      %1021 = vmatpush1.msra.mxu0 %v994
      %1022 = vmatprep.subr.mxu0 0.0
      %1023 = vmatpush1.msra.mxu0 %v995
      %1024 = vmatprep.subr.mxu0 0.0
      %1025 = vmatpush1.msra.mxu0 0.0
      %1026 = vmatprep.subr.mxu0 0.0
      %1027 = vmatpush1.msra.mxu0 0.0
      %1028 = vmatprep.subr.mxu0 0.0
      %1029 = vmatpush1.msra.mxu0 0.0
      %1030 = vmatprep.subr.mxu0 0.0
      %1031 = vmatpush1.msra.mxu0 0.0
      %1032 = vmatprep.subr.mxu0 0.0
      %1033 = vmatpush1.msra.mxu0 0.0
      %1034 = vmatprep.subr.mxu0 0.0
      %1035 = vmatpush1.msra.mxu0 0.0
      %1036 = vmatprep.subr.mxu0 0.0
      %1037 = vmatpush1.msra.mxu0 0.0
      %1038 = vmatprep.subr.mxu0 0.0
      %1039 = vmatpush1.msra.mxu0 0.0
      %1040 = vmatprep.subr.mxu0 0.0
      %1041 = vmatpush1.msra.mxu0 0.0
      %1042 = vmatprep.subr.mxu0 0.0
      %1043 = vmatpush1.msra.mxu0 0.0
      %1044 = vmatprep.subr.mxu0 0.0
      %1045 = vmatpush1.msra.mxu0 0.0
      %1046 = vmatprep.subr.mxu0 0.0
      %1047 = vmatpush1.msra.mxu0 0.0
      %1048 = vmatprep.subr.mxu0 0.0
      %1049 = vmatpush1.msra.mxu0 0.0
      %1050 = vmatprep.subr.mxu0 0.0
      %1051 = vmatpush1.msra.mxu0 0.0
      %1052 = vmatprep.subr.mxu0 0.0
      %1053 = vmatpush1.msra.mxu0 0.0
      %1054 = vmatprep.subr.mxu0 0.0
      %1055 = vmatpush1.msra.mxu0 0.0
      %1056 = vmatprep.subr.mxu0 0.0
      %1057 = vmatpush1.msra.mxu0 0.0
      %1058 = vmatprep.subr.mxu0 0.0
      %1059 = vmatpush1.msra.mxu0 0.0
      %1060 = vmatprep.subr.mxu0 0.0
      %1061 = vmatpush1.msra.mxu0 0.0
      %1062 = vmatprep.subr.mxu0 0.0
      %1063 = vmatpush1.msra.mxu0 0.0
      %1064 = vmatprep.subr.mxu0 0.0
      %1065 = vmatpush1.msra.mxu0 0.0
      %1066 = vmatprep.subr.mxu0 0.0
      %1067 = vmatpush1.msra.mxu0 0.0
      %1068 = vmatprep.subr.mxu0 0.0
      %1069 = vmatpush1.msra.mxu0 0.0
      %1070 = vmatprep.subr.mxu0 0.0
      %1071 = vmatpush1.msra.mxu0 0.0
      %1072 = vmatprep.subr.mxu0 0.0
      %1073 = vmatpush1.msra.mxu0 0.0
      %1074 = vmatprep.subr.mxu0 0.0
      %1075 = vmatpush1.msra.mxu0 0.0
      %1076 = vmatprep.subr.mxu0 0.0
      %1077 = vmatpush1.msra.mxu0 0.0
      %1078 = vmatprep.subr.mxu0 0.0
      %1079 = vmatpush1.msra.mxu0 0.0
      %1080 = vmatprep.subr.mxu0 0.0
      %1081 = vmatpush1.msra.mxu0 0.0
      %1082 = vmatprep.subr.mxu0 0.0
      %1083 = vmatpush1.msra.mxu0 0.0
      %1084 = vmatprep.mubr.f32.mxu0 0.0
      %1085 = vmatmul.mubr.f32.gmra.mrb[0].mxu0 %v997
      %v1086 = vpop.f32.mrb[0].mxu0
      %v1087 = vadd.f32 0.0, %v1086
      %v1088 = vpop.f32.mrb[0].mxu0
      %1089 = vmatprep.mubr.f32.mxu0 0.0
      %1090 = vmatmul.mubr.f32.gmra.mrb[0].mxu0 %v1000
      %v1091 = vpop.f32.mrb[0].mxu0
      %v1092 = vadd.f32 0.0, %v1091
      %v1093 = vpop.f32.mrb[0].mxu0
      %1094 = vmatprep.mubr.f32.mxu0 0.0
      %1095 = vmatmul.mubr.f32.gmra.mrb[0].mxu0 %v1003
      %v1096 = vpop.f32.mrb[0].mxu0
      %v1097 = vadd.f32 0.0, %v1096
      %v1098 = vpop.f32.mrb[0].mxu0
      %1099 = vmatprep.mubr.f32.mxu0 0.0
      %1100 = vmatmul.mubr.f32.gmra.mrb[0].mxu0 %v1006
      %v1101 = vpop.f32.mrb[0].mxu0
      %v1102 = vadd.f32 0.0, %v1101
      %v1103 = vpop.f32.mrb[0].mxu0
      %1104 = vmatprep.mubr.f32.mxu0 0.0
      %1105 = vmatmul.mubr.f32.gmra.mrb[0].mxu0 %v1009
      %v1106 = vpop.f32.mrb[0].mxu0
      %v1107 = vadd.f32 0.0, %v1106
      %v1108 = vpop.f32.mrb[0].mxu0
      %1109 = vmatprep.mubr.f32.mxu0 0.0
      %1110 = vmatmul.mubr.f32.gmra.mrb[0].mxu0 %v1012
      %v1111 = vpop.f32.mrb[0].mxu0
      %v1112 = vadd.f32 0.0, %v1111
      %v1113 = vpop.f32.mrb[0].mxu0
      %1114 = vmatprep.mubr.f32.mxu0 0.0
      %1115 = vmatmul.mubr.f32.gmra.mrb[0].mxu0 %v1015
      %v1116 = vpop.f32.mrb[0].mxu0
      %v1117 = vadd.f32 0.0, %v1116
      %v1118 = vpop.f32.mrb[0].mxu0
      %1119 = vmatprep.mubr.f32.mxu0 0.0
      %1120 = vmatmul.mubr.f32.gmra.mrb[0].mxu0 %v1018
      %v1121 = vpop.f32.mrb[0].mxu0
      %v1122 = vadd.f32 0.0, %v1121
      %v1123 = vpop.f32.mrb[0].mxu0
      %1124 = vdwg.mxu0
      %v1125 = vadd.f32 %v977, %v1087
      %v1126 = vadd.f32 %v978, %v1092
      %v1127 = vadd.f32 %v979, %v1097
      %v1128 = vadd.f32 %v980, %v1102
      %v1129 = vadd.f32 %v981, %v1107
      %v1130 = vadd.f32 %v982, %v1112
      %v1131 = vadd.f32 %v983, %v1117
      %v1132 = vadd.f32 %v984, %v1122
      %v1133 = vld [vmem:[#allocation2 + $0x9] sm:$0xff]
      %v1134 = vld [vmem:[#allocation2 + $0x11] sm:$0xff]
      %v1135 = vld [vmem:[#allocation2 + $0x19] sm:$0xff]
      %v1136 = vld [vmem:[#allocation2 + $0x21] sm:$0xff]
      %v1137 = vld [vmem:[#allocation2 + $0x29] sm:$0xff]
      %v1138 = vld [vmem:[#allocation2 + $0x31] sm:$0xff]
      %v1139 = vld [vmem:[#allocation2 + $0x39] sm:$0xff]
      %v1140 = vld [vmem:[#allocation2 + $0x41] sm:$0xff]
      %s1141 = scalar_lea.vmem %s11, 32
      %v1142 = vld [vmem:[%s1141] sm:$0xff]
      %v1143 = vld [vmem:[%s1141 + $0x8] sm:$0xff]
      %v1145 = vsel %vm529, %v1133, 0
      %v1148 = vsel %vm529, %v1134, 0
      %v1151 = vsel %vm529, %v1135, 0
      %v1154 = vsel %vm529, %v1136, 0
      %v1157 = vsel %vm529, %v1137, 0
      %v1160 = vsel %vm529, %v1138, 0
      %v1163 = vsel %vm529, %v1139, 0
      %v1166 = vsel %vm529, %v1140, 0
      %1168 = vmatprep.subr.mxu0 0.0
      %1169 = vmatpush1.msra.mxu0 %v1142
      %1170 = vmatprep.subr.mxu0 0.0
      %1171 = vmatpush1.msra.mxu0 %v1143
      %1172 = vmatprep.subr.mxu0 0.0
      %1173 = vmatpush1.msra.mxu0 0.0
      %1174 = vmatprep.subr.mxu0 0.0
      %1175 = vmatpush1.msra.mxu0 0.0
      %1176 = vmatprep.subr.mxu0 0.0
      %1177 = vmatpush1.msra.mxu0 0.0
      %1178 = vmatprep.subr.mxu0 0.0
      %1179 = vmatpush1.msra.mxu0 0.0
      %1180 = vmatprep.subr.mxu0 0.0
      %1181 = vmatpush1.msra.mxu0 0.0
      %1182 = vmatprep.subr.mxu0 0.0
      %1183 = vmatpush1.msra.mxu0 0.0
      %1184 = vmatprep.subr.mxu0 0.0
      %1185 = vmatpush1.msra.mxu0 0.0
      %1186 = vmatprep.subr.mxu0 0.0
      %1187 = vmatpush1.msra.mxu0 0.0
      %1188 = vmatprep.subr.mxu0 0.0
      %1189 = vmatpush1.msra.mxu0 0.0
      %1190 = vmatprep.subr.mxu0 0.0
      %1191 = vmatpush1.msra.mxu0 0.0
      %1192 = vmatprep.subr.mxu0 0.0
      %1193 = vmatpush1.msra.mxu0 0.0
      %1194 = vmatprep.subr.mxu0 0.0
      %1195 = vmatpush1.msra.mxu0 0.0
      %1196 = vmatprep.subr.mxu0 0.0
      %1197 = vmatpush1.msra.mxu0 0.0
      %1198 = vmatprep.subr.mxu0 0.0
      %1199 = vmatpush1.msra.mxu0 0.0
      %1200 = vmatprep.subr.mxu0 0.0
      %1201 = vmatpush1.msra.mxu0 0.0
      %1202 = vmatprep.subr.mxu0 0.0
      %1203 = vmatpush1.msra.mxu0 0.0
      %1204 = vmatprep.subr.mxu0 0.0
      %1205 = vmatpush1.msra.mxu0 0.0
      %1206 = vmatprep.subr.mxu0 0.0
      %1207 = vmatpush1.msra.mxu0 0.0
      %1208 = vmatprep.subr.mxu0 0.0
      %1209 = vmatpush1.msra.mxu0 0.0
      %1210 = vmatprep.subr.mxu0 0.0
      %1211 = vmatpush1.msra.mxu0 0.0
      %1212 = vmatprep.subr.mxu0 0.0
      %1213 = vmatpush1.msra.mxu0 0.0
      %1214 = vmatprep.subr.mxu0 0.0
      %1215 = vmatpush1.msra.mxu0 0.0
      %1216 = vmatprep.subr.mxu0 0.0
      %1217 = vmatpush1.msra.mxu0 0.0
      %1218 = vmatprep.subr.mxu0 0.0
      %1219 = vmatpush1.msra.mxu0 0.0
      %1220 = vmatprep.subr.mxu0 0.0
      %1221 = vmatpush1.msra.mxu0 0.0
      %1222 = vmatprep.subr.mxu0 0.0
      %1223 = vmatpush1.msra.mxu0 0.0
      %1224 = vmatprep.subr.mxu0 0.0
      %1225 = vmatpush1.msra.mxu0 0.0
      %1226 = vmatprep.subr.mxu0 0.0
      %1227 = vmatpush1.msra.mxu0 0.0
      %1228 = vmatprep.subr.mxu0 0.0
      %1229 = vmatpush1.msra.mxu0 0.0
      %1230 = vmatprep.subr.mxu0 0.0
      %1231 = vmatpush1.msra.mxu0 0.0
      %1232 = vmatprep.mubr.f32.mxu0 0.0
      %1233 = vmatmul.mubr.f32.gmra.mrb[0].mxu0 %v1145
      %v1234 = vpop.f32.mrb[0].mxu0
      %v1235 = vadd.f32 0.0, %v1234
      %v1236 = vpop.f32.mrb[0].mxu0
      %1237 = vmatprep.mubr.f32.mxu0 0.0
      %1238 = vmatmul.mubr.f32.gmra.mrb[0].mxu0 %v1148
      %v1239 = vpop.f32.mrb[0].mxu0
      %v1240 = vadd.f32 0.0, %v1239
      %v1241 = vpop.f32.mrb[0].mxu0
      %1242 = vmatprep.mubr.f32.mxu0 0.0
      %1243 = vmatmul.mubr.f32.gmra.mrb[0].mxu0 %v1151
      %v1244 = vpop.f32.mrb[0].mxu0
      %v1245 = vadd.f32 0.0, %v1244
      %v1246 = vpop.f32.mrb[0].mxu0
      %1247 = vmatprep.mubr.f32.mxu0 0.0
      %1248 = vmatmul.mubr.f32.gmra.mrb[0].mxu0 %v1154
      %v1249 = vpop.f32.mrb[0].mxu0
      %v1250 = vadd.f32 0.0, %v1249
      %v1251 = vpop.f32.mrb[0].mxu0
      %1252 = vmatprep.mubr.f32.mxu0 0.0
      %1253 = vmatmul.mubr.f32.gmra.mrb[0].mxu0 %v1157
      %v1254 = vpop.f32.mrb[0].mxu0
      %v1255 = vadd.f32 0.0, %v1254
      %v1256 = vpop.f32.mrb[0].mxu0
      %1257 = vmatprep.mubr.f32.mxu0 0.0
      %1258 = vmatmul.mubr.f32.gmra.mrb[0].mxu0 %v1160
      %v1259 = vpop.f32.mrb[0].mxu0
      %v1260 = vadd.f32 0.0, %v1259
      %v1261 = vpop.f32.mrb[0].mxu0
      %1262 = vmatprep.mubr.f32.mxu0 0.0
      %1263 = vmatmul.mubr.f32.gmra.mrb[0].mxu0 %v1163
      %v1264 = vpop.f32.mrb[0].mxu0
      %v1265 = vadd.f32 0.0, %v1264
      %v1266 = vpop.f32.mrb[0].mxu0
      %1267 = vmatprep.mubr.f32.mxu0 0.0
      %1268 = vmatmul.mubr.f32.gmra.mrb[0].mxu0 %v1166
      %v1269 = vpop.f32.mrb[0].mxu0
      %v1270 = vadd.f32 0.0, %v1269
      %v1271 = vpop.f32.mrb[0].mxu0
      %1272 = vdwg.mxu0
      %vm1273 = vcmp.lt.s32.totalorder %v814, 7
      %vm1274 = vcmp.lt.s32.totalorder %v815, 7
      %vm1275 = vcmp.lt.s32.totalorder %v816, 7
      %vm1276 = vcmp.lt.s32.totalorder %v817, 7
      %vm1277 = vcmp.lt.s32.totalorder %v818, 7
      %vm1278 = vcmp.lt.s32.totalorder %v819, 7
      %vm1279 = vcmp.lt.s32.totalorder %v820, 7
      %vm1280 = vcmp.lt.s32.totalorder %v821, 7
      %v1281 = vsel %vm1273, %v1235, 0.0
      %v1282 = vsel %vm1274, %v1240, 0.0
      %v1283 = vsel %vm1275, %v1245, 0.0
      %v1284 = vsel %vm1276, %v1250, 0.0
      %v1285 = vsel %vm1277, %v1255, 0.0
      %v1286 = vsel %vm1278, %v1260, 0.0
      %v1287 = vsel %vm1279, %v1265, 0.0
      %v1288 = vsel %vm1280, %v1270, 0.0
      %v1289 = vadd.f32 %v1125, %v1281
      %v1290 = vadd.f32 %v1126, %v1282
      %v1291 = vadd.f32 %v1127, %v1283
      %v1292 = vadd.f32 %v1128, %v1284
      %v1293 = vadd.f32 %v1129, %v1285
      %v1294 = vadd.f32 %v1130, %v1286
      %v1295 = vadd.f32 %v1131, %v1287
      %v1296 = vadd.f32 %v1132, %v1288
      %v1297 = vld [vmem:[#allocation2 + $0xf] sm:$0xff]
      %v1298 = vld [vmem:[#allocation2 + $0x17] sm:$0xff]
      %v1299 = vld [vmem:[#allocation2 + $0x1f] sm:$0xff]
      %v1300 = vld [vmem:[#allocation2 + $0x27] sm:$0xff]
      %v1301 = vld [vmem:[#allocation2 + $0x2f] sm:$0xff]
      %v1302 = vld [vmem:[#allocation2 + $0x37] sm:$0xff]
      %v1303 = vld [vmem:[#allocation2 + $0x3f] sm:$0xff]
      %v1304 = vld [vmem:[#allocation2 + $0x47] sm:$0xff]
      %s1305 = scalar_lea.vmem %s11, 48
      %v1306 = vld [vmem:[%s1305] sm:$0xff]
      %v1307 = vld [vmem:[%s1305 + $0x8] sm:$0xff]
      %v1309 = vsel %vm529, %v1297, 0
      %v1312 = vsel %vm529, %v1298, 0
      %v1315 = vsel %vm529, %v1299, 0
      %v1318 = vsel %vm529, %v1300, 0
      %v1321 = vsel %vm529, %v1301, 0
      %v1324 = vsel %vm529, %v1302, 0
      %v1327 = vsel %vm529, %v1303, 0
      %v1330 = vsel %vm529, %v1304, 0
      %1332 = vmatprep.subr.mxu0 0.0
      %1333 = vmatpush1.msra.mxu0 %v1306
      %1334 = vmatprep.subr.mxu0 0.0
      %1335 = vmatpush1.msra.mxu0 %v1307
      %1336 = vmatprep.subr.mxu0 0.0
      %1337 = vmatpush1.msra.mxu0 0.0
      %1338 = vmatprep.subr.mxu0 0.0
      %1339 = vmatpush1.msra.mxu0 0.0
      %1340 = vmatprep.subr.mxu0 0.0
      %1341 = vmatpush1.msra.mxu0 0.0
      %1342 = vmatprep.subr.mxu0 0.0
      %1343 = vmatpush1.msra.mxu0 0.0
      %1344 = vmatprep.subr.mxu0 0.0
      %1345 = vmatpush1.msra.mxu0 0.0
      %1346 = vmatprep.subr.mxu0 0.0
      %1347 = vmatpush1.msra.mxu0 0.0
      %1348 = vmatprep.subr.mxu0 0.0
      %1349 = vmatpush1.msra.mxu0 0.0
      %1350 = vmatprep.subr.mxu0 0.0
      %1351 = vmatpush1.msra.mxu0 0.0
      %1352 = vmatprep.subr.mxu0 0.0
      %1353 = vmatpush1.msra.mxu0 0.0
      %1354 = vmatprep.subr.mxu0 0.0
      %1355 = vmatpush1.msra.mxu0 0.0
      %1356 = vmatprep.subr.mxu0 0.0
      %1357 = vmatpush1.msra.mxu0 0.0
      %1358 = vmatprep.subr.mxu0 0.0
      %1359 = vmatpush1.msra.mxu0 0.0
      %1360 = vmatprep.subr.mxu0 0.0
      %1361 = vmatpush1.msra.mxu0 0.0
      %1362 = vmatprep.subr.mxu0 0.0
      %1363 = vmatpush1.msra.mxu0 0.0
      %1364 = vmatprep.subr.mxu0 0.0
      %1365 = vmatpush1.msra.mxu0 0.0
      %1366 = vmatprep.subr.mxu0 0.0
      %1367 = vmatpush1.msra.mxu0 0.0
      %1368 = vmatprep.subr.mxu0 0.0
      %1369 = vmatpush1.msra.mxu0 0.0
      %1370 = vmatprep.subr.mxu0 0.0
      %1371 = vmatpush1.msra.mxu0 0.0
      %1372 = vmatprep.subr.mxu0 0.0
      %1373 = vmatpush1.msra.mxu0 0.0
      %1374 = vmatprep.subr.mxu0 0.0
      %1375 = vmatpush1.msra.mxu0 0.0
      %1376 = vmatprep.subr.mxu0 0.0
      %1377 = vmatpush1.msra.mxu0 0.0
      %1378 = vmatprep.subr.mxu0 0.0
      %1379 = vmatpush1.msra.mxu0 0.0
      %1380 = vmatprep.subr.mxu0 0.0
      %1381 = vmatpush1.msra.mxu0 0.0
      %1382 = vmatprep.subr.mxu0 0.0
      %1383 = vmatpush1.msra.mxu0 0.0
      %1384 = vmatprep.subr.mxu0 0.0
      %1385 = vmatpush1.msra.mxu0 0.0
      %1386 = vmatprep.subr.mxu0 0.0
      %1387 = vmatpush1.msra.mxu0 0.0
      %1388 = vmatprep.subr.mxu0 0.0
      %1389 = vmatpush1.msra.mxu0 0.0
      %1390 = vmatprep.subr.mxu0 0.0
      %1391 = vmatpush1.msra.mxu0 0.0
      %1392 = vmatprep.subr.mxu0 0.0
      %1393 = vmatpush1.msra.mxu0 0.0
      %1394 = vmatprep.subr.mxu0 0.0
      %1395 = vmatpush1.msra.mxu0 0.0
      %1396 = vmatprep.mubr.f32.mxu0 0.0
      %1397 = vmatmul.mubr.f32.gmra.mrb[0].mxu0 %v1309
      %v1398 = vpop.f32.mrb[0].mxu0
      %v1399 = vadd.f32 0.0, %v1398
      %v1400 = vpop.f32.mrb[0].mxu0
      %1401 = vmatprep.mubr.f32.mxu0 0.0
      %1402 = vmatmul.mubr.f32.gmra.mrb[0].mxu0 %v1312
      %v1403 = vpop.f32.mrb[0].mxu0
      %v1404 = vadd.f32 0.0, %v1403
      %v1405 = vpop.f32.mrb[0].mxu0
      %1406 = vmatprep.mubr.f32.mxu0 0.0
      %1407 = vmatmul.mubr.f32.gmra.mrb[0].mxu0 %v1315
      %v1408 = vpop.f32.mrb[0].mxu0
      %v1409 = vadd.f32 0.0, %v1408
      %v1410 = vpop.f32.mrb[0].mxu0
      %1411 = vmatprep.mubr.f32.mxu0 0.0
      %1412 = vmatmul.mubr.f32.gmra.mrb[0].mxu0 %v1318
      %v1413 = vpop.f32.mrb[0].mxu0
      %v1414 = vadd.f32 0.0, %v1413
      %v1415 = vpop.f32.mrb[0].mxu0
      %1416 = vmatprep.mubr.f32.mxu0 0.0
      %1417 = vmatmul.mubr.f32.gmra.mrb[0].mxu0 %v1321
      %v1418 = vpop.f32.mrb[0].mxu0
      %v1419 = vadd.f32 0.0, %v1418
      %v1420 = vpop.f32.mrb[0].mxu0
      %1421 = vmatprep.mubr.f32.mxu0 0.0
      %1422 = vmatmul.mubr.f32.gmra.mrb[0].mxu0 %v1324
      %v1423 = vpop.f32.mrb[0].mxu0
      %v1424 = vadd.f32 0.0, %v1423
      %v1425 = vpop.f32.mrb[0].mxu0
      %1426 = vmatprep.mubr.f32.mxu0 0.0
      %1427 = vmatmul.mubr.f32.gmra.mrb[0].mxu0 %v1327
      %v1428 = vpop.f32.mrb[0].mxu0
      %v1429 = vadd.f32 0.0, %v1428
      %v1430 = vpop.f32.mrb[0].mxu0
      %1431 = vmatprep.mubr.f32.mxu0 0.0
      %1432 = vmatmul.mubr.f32.gmra.mrb[0].mxu0 %v1330
      %v1433 = vpop.f32.mrb[0].mxu0
      %v1434 = vadd.f32 0.0, %v1433
      %v1435 = vpop.f32.mrb[0].mxu0
      %1436 = vdwg.mxu0
      %v1437 = vsel %vm961, %v1399, 0.0
      %v1438 = vsel %vm962, %v1404, 0.0
      %v1439 = vsel %vm963, %v1409, 0.0
      %v1440 = vsel %vm964, %v1414, 0.0
      %v1441 = vsel %vm965, %v1419, 0.0
      %v1442 = vsel %vm966, %v1424, 0.0
      %v1443 = vsel %vm967, %v1429, 0.0
      %v1444 = vsel %vm968, %v1434, 0.0
      %v1445 = vadd.f32 %v1289, %v1437
      %v1446 = vadd.f32 %v1290, %v1438
      %v1447 = vadd.f32 %v1291, %v1439
      %v1448 = vadd.f32 %v1292, %v1440
      %v1449 = vadd.f32 %v1293, %v1441
      %v1450 = vadd.f32 %v1294, %v1442
      %v1451 = vadd.f32 %v1295, %v1443
      %v1452 = vadd.f32 %v1296, %v1444
      %v1453 = vld [vmem:[#allocation2 + $0x10] sm:$0xff]
      %v1454 = vld [vmem:[#allocation2 + $0x18] sm:$0xff]
      %v1455 = vld [vmem:[#allocation2 + $0x20] sm:$0xff]
      %v1456 = vld [vmem:[#allocation2 + $0x28] sm:$0xff]
      %v1457 = vld [vmem:[#allocation2 + $0x30] sm:$0xff]
      %v1458 = vld [vmem:[#allocation2 + $0x38] sm:$0xff]
      %v1459 = vld [vmem:[#allocation2 + $0x40] sm:$0xff]
      %v1460 = vld [vmem:[#allocation2 + $0x48] sm:$0xff]
      %s1461 = scalar_lea.vmem %s11, 64
      %v1462 = vld [vmem:[%s1461] sm:$0xff]
      %v1463 = vld [vmem:[%s1461 + $0x8] sm:$0xff]
      %v1465 = vsel %vm529, %v1453, 0
      %v1468 = vsel %vm529, %v1454, 0
      %v1471 = vsel %vm529, %v1455, 0
      %v1474 = vsel %vm529, %v1456, 0
      %v1477 = vsel %vm529, %v1457, 0
      %v1480 = vsel %vm529, %v1458, 0
      %v1483 = vsel %vm529, %v1459, 0
      %v1486 = vsel %vm529, %v1460, 0
      %1488 = vmatprep.subr.mxu0 0.0
      %1489 = vmatpush1.msra.mxu0 %v1462
      %1490 = vmatprep.subr.mxu0 0.0
      %1491 = vmatpush1.msra.mxu0 %v1463
      %1492 = vmatprep.subr.mxu0 0.0
      %1493 = vmatpush1.msra.mxu0 0.0
      %1494 = vmatprep.subr.mxu0 0.0
      %1495 = vmatpush1.msra.mxu0 0.0
      %1496 = vmatprep.subr.mxu0 0.0
      %1497 = vmatpush1.msra.mxu0 0.0
      %1498 = vmatprep.subr.mxu0 0.0
      %1499 = vmatpush1.msra.mxu0 0.0
      %1500 = vmatprep.subr.mxu0 0.0
      %1501 = vmatpush1.msra.mxu0 0.0
      %1502 = vmatprep.subr.mxu0 0.0
      %1503 = vmatpush1.msra.mxu0 0.0
      %1504 = vmatprep.subr.mxu0 0.0
      %1505 = vmatpush1.msra.mxu0 0.0
      %1506 = vmatprep.subr.mxu0 0.0
      %1507 = vmatpush1.msra.mxu0 0.0
      %1508 = vmatprep.subr.mxu0 0.0
      %1509 = vmatpush1.msra.mxu0 0.0
      %1510 = vmatprep.subr.mxu0 0.0
      %1511 = vmatpush1.msra.mxu0 0.0
      %1512 = vmatprep.subr.mxu0 0.0
      %1513 = vmatpush1.msra.mxu0 0.0
      %1514 = vmatprep.subr.mxu0 0.0
      %1515 = vmatpush1.msra.mxu0 0.0
      %1516 = vmatprep.subr.mxu0 0.0
      %1517 = vmatpush1.msra.mxu0 0.0
      %1518 = vmatprep.subr.mxu0 0.0
      %1519 = vmatpush1.msra.mxu0 0.0
      %1520 = vmatprep.subr.mxu0 0.0
      %1521 = vmatpush1.msra.mxu0 0.0
      %1522 = vmatprep.subr.mxu0 0.0
      %1523 = vmatpush1.msra.mxu0 0.0
      %1524 = vmatprep.subr.mxu0 0.0
      %1525 = vmatpush1.msra.mxu0 0.0
      %1526 = vmatprep.subr.mxu0 0.0
      %1527 = vmatpush1.msra.mxu0 0.0
      %1528 = vmatprep.subr.mxu0 0.0
      %1529 = vmatpush1.msra.mxu0 0.0
      %1530 = vmatprep.subr.mxu0 0.0
      %1531 = vmatpush1.msra.mxu0 0.0
      %1532 = vmatprep.subr.mxu0 0.0
      %1533 = vmatpush1.msra.mxu0 0.0
      %1534 = vmatprep.subr.mxu0 0.0
      %1535 = vmatpush1.msra.mxu0 0.0
      %1536 = vmatprep.subr.mxu0 0.0
      %1537 = vmatpush1.msra.mxu0 0.0
      %1538 = vmatprep.subr.mxu0 0.0
      %1539 = vmatpush1.msra.mxu0 0.0
      %1540 = vmatprep.subr.mxu0 0.0
      %1541 = vmatpush1.msra.mxu0 0.0
      %1542 = vmatprep.subr.mxu0 0.0
      %1543 = vmatpush1.msra.mxu0 0.0
      %1544 = vmatprep.subr.mxu0 0.0
      %1545 = vmatpush1.msra.mxu0 0.0
      %1546 = vmatprep.subr.mxu0 0.0
      %1547 = vmatpush1.msra.mxu0 0.0
      %1548 = vmatprep.subr.mxu0 0.0
      %1549 = vmatpush1.msra.mxu0 0.0
      %1550 = vmatprep.subr.mxu0 0.0
      %1551 = vmatpush1.msra.mxu0 0.0
      %1552 = vmatprep.mubr.f32.mxu0 0.0
      %1553 = vmatmul.mubr.f32.gmra.mrb[0].mxu0 %v1465
      %v1554 = vpop.f32.mrb[0].mxu0
      %v1555 = vadd.f32 0.0, %v1554
      %v1556 = vpop.f32.mrb[0].mxu0
      %1557 = vmatprep.mubr.f32.mxu0 0.0
      %1558 = vmatmul.mubr.f32.gmra.mrb[0].mxu0 %v1468
      %v1559 = vpop.f32.mrb[0].mxu0
      %v1560 = vadd.f32 0.0, %v1559
      %v1561 = vpop.f32.mrb[0].mxu0
      %1562 = vmatprep.mubr.f32.mxu0 0.0
      %1563 = vmatmul.mubr.f32.gmra.mrb[0].mxu0 %v1471
      %v1564 = vpop.f32.mrb[0].mxu0
      %v1565 = vadd.f32 0.0, %v1564
      %v1566 = vpop.f32.mrb[0].mxu0
      %1567 = vmatprep.mubr.f32.mxu0 0.0
      %1568 = vmatmul.mubr.f32.gmra.mrb[0].mxu0 %v1474
      %v1569 = vpop.f32.mrb[0].mxu0
      %v1570 = vadd.f32 0.0, %v1569
      %v1571 = vpop.f32.mrb[0].mxu0
      %1572 = vmatprep.mubr.f32.mxu0 0.0
      %1573 = vmatmul.mubr.f32.gmra.mrb[0].mxu0 %v1477
      %v1574 = vpop.f32.mrb[0].mxu0
      %v1575 = vadd.f32 0.0, %v1574
      %v1576 = vpop.f32.mrb[0].mxu0
      %1577 = vmatprep.mubr.f32.mxu0 0.0
      %1578 = vmatmul.mubr.f32.gmra.mrb[0].mxu0 %v1480
      %v1579 = vpop.f32.mrb[0].mxu0
      %v1580 = vadd.f32 0.0, %v1579
      %v1581 = vpop.f32.mrb[0].mxu0
      %1582 = vmatprep.mubr.f32.mxu0 0.0
      %1583 = vmatmul.mubr.f32.gmra.mrb[0].mxu0 %v1483
      %v1584 = vpop.f32.mrb[0].mxu0
      %v1585 = vadd.f32 0.0, %v1584
      %v1586 = vpop.f32.mrb[0].mxu0
      %1587 = vmatprep.mubr.f32.mxu0 0.0
      %1588 = vmatmul.mubr.f32.gmra.mrb[0].mxu0 %v1486
      %v1589 = vpop.f32.mrb[0].mxu0
      %v1590 = vadd.f32 0.0, %v1589
      %v1591 = vpop.f32.mrb[0].mxu0
      %1592 = vdwg.mxu0
      %v1593 = vadd.f32 %v1445, %v1555
      %v1594 = vadd.f32 %v1446, %v1560
      %v1595 = vadd.f32 %v1447, %v1565
      %v1596 = vadd.f32 %v1448, %v1570
      %v1597 = vadd.f32 %v1449, %v1575
      %v1598 = vadd.f32 %v1450, %v1580
      %v1599 = vadd.f32 %v1451, %v1585
      %v1600 = vadd.f32 %v1452, %v1590
      %v1601 = vld [vmem:[#allocation2 + $0x11] sm:$0xff]
      %v1602 = vld [vmem:[#allocation2 + $0x19] sm:$0xff]
      %v1603 = vld [vmem:[#allocation2 + $0x21] sm:$0xff]
      %v1604 = vld [vmem:[#allocation2 + $0x29] sm:$0xff]
      %v1605 = vld [vmem:[#allocation2 + $0x31] sm:$0xff]
      %v1606 = vld [vmem:[#allocation2 + $0x39] sm:$0xff]
      %v1607 = vld [vmem:[#allocation2 + $0x41] sm:$0xff]
      %v1608 = vld [vmem:[#allocation2 + $0x49] sm:$0xff]
      %s1609 = scalar_lea.vmem %s11, 80
      %v1610 = vld [vmem:[%s1609] sm:$0xff]
      %v1611 = vld [vmem:[%s1609 + $0x8] sm:$0xff]
      %v1613 = vsel %vm529, %v1601, 0
      %v1616 = vsel %vm529, %v1602, 0
      %v1619 = vsel %vm529, %v1603, 0
      %v1622 = vsel %vm529, %v1604, 0
      %v1625 = vsel %vm529, %v1605, 0
      %v1628 = vsel %vm529, %v1606, 0
      %v1631 = vsel %vm529, %v1607, 0
      %v1634 = vsel %vm529, %v1608, 0
      %1636 = vmatprep.subr.mxu0 0.0
      %1637 = vmatpush1.msra.mxu0 %v1610
      %1638 = vmatprep.subr.mxu0 0.0
      %1639 = vmatpush1.msra.mxu0 %v1611
      %1640 = vmatprep.subr.mxu0 0.0
      %1641 = vmatpush1.msra.mxu0 0.0
      %1642 = vmatprep.subr.mxu0 0.0
      %1643 = vmatpush1.msra.mxu0 0.0
      %1644 = vmatprep.subr.mxu0 0.0
      %1645 = vmatpush1.msra.mxu0 0.0
      %1646 = vmatprep.subr.mxu0 0.0
      %1647 = vmatpush1.msra.mxu0 0.0
      %1648 = vmatprep.subr.mxu0 0.0
      %1649 = vmatpush1.msra.mxu0 0.0
      %1650 = vmatprep.subr.mxu0 0.0
      %1651 = vmatpush1.msra.mxu0 0.0
      %1652 = vmatprep.subr.mxu0 0.0
      %1653 = vmatpush1.msra.mxu0 0.0
      %1654 = vmatprep.subr.mxu0 0.0
      %1655 = vmatpush1.msra.mxu0 0.0
      %1656 = vmatprep.subr.mxu0 0.0
      %1657 = vmatpush1.msra.mxu0 0.0
      %1658 = vmatprep.subr.mxu0 0.0
      %1659 = vmatpush1.msra.mxu0 0.0
      %1660 = vmatprep.subr.mxu0 0.0
      %1661 = vmatpush1.msra.mxu0 0.0
      %1662 = vmatprep.subr.mxu0 0.0
      %1663 = vmatpush1.msra.mxu0 0.0
      %1664 = vmatprep.subr.mxu0 0.0
      %1665 = vmatpush1.msra.mxu0 0.0
      %1666 = vmatprep.subr.mxu0 0.0
      %1667 = vmatpush1.msra.mxu0 0.0
      %1668 = vmatprep.subr.mxu0 0.0
      %1669 = vmatpush1.msra.mxu0 0.0
      %1670 = vmatprep.subr.mxu0 0.0
      %1671 = vmatpush1.msra.mxu0 0.0
      %1672 = vmatprep.subr.mxu0 0.0
      %1673 = vmatpush1.msra.mxu0 0.0
      %1674 = vmatprep.subr.mxu0 0.0
      %1675 = vmatpush1.msra.mxu0 0.0
      %1676 = vmatprep.subr.mxu0 0.0
      %1677 = vmatpush1.msra.mxu0 0.0
      %1678 = vmatprep.subr.mxu0 0.0
      %1679 = vmatpush1.msra.mxu0 0.0
      %1680 = vmatprep.subr.mxu0 0.0
      %1681 = vmatpush1.msra.mxu0 0.0
      %1682 = vmatprep.subr.mxu0 0.0
      %1683 = vmatpush1.msra.mxu0 0.0
      %1684 = vmatprep.subr.mxu0 0.0
      %1685 = vmatpush1.msra.mxu0 0.0
      %1686 = vmatprep.subr.mxu0 0.0
      %1687 = vmatpush1.msra.mxu0 0.0
      %1688 = vmatprep.subr.mxu0 0.0
      %1689 = vmatpush1.msra.mxu0 0.0
      %1690 = vmatprep.subr.mxu0 0.0
      %1691 = vmatpush1.msra.mxu0 0.0
      %1692 = vmatprep.subr.mxu0 0.0
      %1693 = vmatpush1.msra.mxu0 0.0
      %1694 = vmatprep.subr.mxu0 0.0
      %1695 = vmatpush1.msra.mxu0 0.0
      %1696 = vmatprep.subr.mxu0 0.0
      %1697 = vmatpush1.msra.mxu0 0.0
      %1698 = vmatprep.subr.mxu0 0.0
      %1699 = vmatpush1.msra.mxu0 0.0
      %1700 = vmatprep.mubr.f32.mxu0 0.0
      %1701 = vmatmul.mubr.f32.gmra.mrb[0].mxu0 %v1613
      %v1702 = vpop.f32.mrb[0].mxu0
      %v1703 = vadd.f32 0.0, %v1702
      %v1704 = vpop.f32.mrb[0].mxu0
      %1705 = vmatprep.mubr.f32.mxu0 0.0
      %1706 = vmatmul.mubr.f32.gmra.mrb[0].mxu0 %v1616
      %v1707 = vpop.f32.mrb[0].mxu0
      %v1708 = vadd.f32 0.0, %v1707
      %v1709 = vpop.f32.mrb[0].mxu0
      %1710 = vmatprep.mubr.f32.mxu0 0.0
      %1711 = vmatmul.mubr.f32.gmra.mrb[0].mxu0 %v1619
      %v1712 = vpop.f32.mrb[0].mxu0
      %v1713 = vadd.f32 0.0, %v1712
      %v1714 = vpop.f32.mrb[0].mxu0
      %1715 = vmatprep.mubr.f32.mxu0 0.0
      %1716 = vmatmul.mubr.f32.gmra.mrb[0].mxu0 %v1622
      %v1717 = vpop.f32.mrb[0].mxu0
      %v1718 = vadd.f32 0.0, %v1717
      %v1719 = vpop.f32.mrb[0].mxu0
      %1720 = vmatprep.mubr.f32.mxu0 0.0
      %1721 = vmatmul.mubr.f32.gmra.mrb[0].mxu0 %v1625
      %v1722 = vpop.f32.mrb[0].mxu0
      %v1723 = vadd.f32 0.0, %v1722
      %v1724 = vpop.f32.mrb[0].mxu0
      %1725 = vmatprep.mubr.f32.mxu0 0.0
      %1726 = vmatmul.mubr.f32.gmra.mrb[0].mxu0 %v1628
      %v1727 = vpop.f32.mrb[0].mxu0
      %v1728 = vadd.f32 0.0, %v1727
      %v1729 = vpop.f32.mrb[0].mxu0
      %1730 = vmatprep.mubr.f32.mxu0 0.0
      %1731 = vmatmul.mubr.f32.gmra.mrb[0].mxu0 %v1631
      %v1732 = vpop.f32.mrb[0].mxu0
      %v1733 = vadd.f32 0.0, %v1732
      %v1734 = vpop.f32.mrb[0].mxu0
      %1735 = vmatprep.mubr.f32.mxu0 0.0
      %1736 = vmatmul.mubr.f32.gmra.mrb[0].mxu0 %v1634
      %v1737 = vpop.f32.mrb[0].mxu0
      %v1738 = vadd.f32 0.0, %v1737
      %v1739 = vpop.f32.mrb[0].mxu0
      %1740 = vdwg.mxu0
      %v1741 = vsel %vm1273, %v1703, 0.0
      %v1742 = vsel %vm1274, %v1708, 0.0
      %v1743 = vsel %vm1275, %v1713, 0.0
      %v1744 = vsel %vm1276, %v1718, 0.0
      %v1745 = vsel %vm1277, %v1723, 0.0
      %v1746 = vsel %vm1278, %v1728, 0.0
      %v1747 = vsel %vm1279, %v1733, 0.0
      %v1748 = vsel %vm1280, %v1738, 0.0
      %v1749 = vadd.f32 %v1593, %v1741
      %v1750 = vadd.f32 %v1594, %v1742
      %v1751 = vadd.f32 %v1595, %v1743
      %v1752 = vadd.f32 %v1596, %v1744
      %v1753 = vadd.f32 %v1597, %v1745
      %v1754 = vadd.f32 %v1598, %v1746
      %v1755 = vadd.f32 %v1599, %v1747
      %v1756 = vadd.f32 %v1600, %v1748
      %v1757 = vld [vmem:[#allocation2 + $0x17] sm:$0xff]
      %v1758 = vld [vmem:[#allocation2 + $0x1f] sm:$0xff]
      %v1759 = vld [vmem:[#allocation2 + $0x27] sm:$0xff]
      %v1760 = vld [vmem:[#allocation2 + $0x2f] sm:$0xff]
      %v1761 = vld [vmem:[#allocation2 + $0x37] sm:$0xff]
      %v1762 = vld [vmem:[#allocation2 + $0x3f] sm:$0xff]
      %v1763 = vld [vmem:[#allocation2 + $0x47] sm:$0xff]
      %v1764 = vld [vmem:[#allocation2 + $0x4f] sm:$0xff]
      %s1765 = scalar_lea.vmem %s11, 96
      %v1766 = vld [vmem:[%s1765] sm:$0xff]
      %v1767 = vld [vmem:[%s1765 + $0x8] sm:$0xff]
      %v1769 = vsel %vm529, %v1757, 0
      %v1772 = vsel %vm529, %v1758, 0
      %v1775 = vsel %vm529, %v1759, 0
      %v1778 = vsel %vm529, %v1760, 0
      %v1781 = vsel %vm529, %v1761, 0
      %v1784 = vsel %vm529, %v1762, 0
      %v1787 = vsel %vm529, %v1763, 0
      %v1790 = vsel %vm529, %v1764, 0
      %1792 = vmatprep.subr.mxu0 0.0
      %1793 = vmatpush1.msra.mxu0 %v1766
      %1794 = vmatprep.subr.mxu0 0.0
      %1795 = vmatpush1.msra.mxu0 %v1767
      %1796 = vmatprep.subr.mxu0 0.0
      %1797 = vmatpush1.msra.mxu0 0.0
      %1798 = vmatprep.subr.mxu0 0.0
      %1799 = vmatpush1.msra.mxu0 0.0
      %1800 = vmatprep.subr.mxu0 0.0
      %1801 = vmatpush1.msra.mxu0 0.0
      %1802 = vmatprep.subr.mxu0 0.0
      %1803 = vmatpush1.msra.mxu0 0.0
      %1804 = vmatprep.subr.mxu0 0.0
      %1805 = vmatpush1.msra.mxu0 0.0
      %1806 = vmatprep.subr.mxu0 0.0
      %1807 = vmatpush1.msra.mxu0 0.0
      %1808 = vmatprep.subr.mxu0 0.0
      %1809 = vmatpush1.msra.mxu0 0.0
      %1810 = vmatprep.subr.mxu0 0.0
      %1811 = vmatpush1.msra.mxu0 0.0
      %1812 = vmatprep.subr.mxu0 0.0
      %1813 = vmatpush1.msra.mxu0 0.0
      %1814 = vmatprep.subr.mxu0 0.0
      %1815 = vmatpush1.msra.mxu0 0.0
      %1816 = vmatprep.subr.mxu0 0.0
      %1817 = vmatpush1.msra.mxu0 0.0
      %1818 = vmatprep.subr.mxu0 0.0
      %1819 = vmatpush1.msra.mxu0 0.0
      %1820 = vmatprep.subr.mxu0 0.0
      %1821 = vmatpush1.msra.mxu0 0.0
      %1822 = vmatprep.subr.mxu0 0.0
      %1823 = vmatpush1.msra.mxu0 0.0
      %1824 = vmatprep.subr.mxu0 0.0
      %1825 = vmatpush1.msra.mxu0 0.0
      %1826 = vmatprep.subr.mxu0 0.0
      %1827 = vmatpush1.msra.mxu0 0.0
      %1828 = vmatprep.subr.mxu0 0.0
      %1829 = vmatpush1.msra.mxu0 0.0
      %1830 = vmatprep.subr.mxu0 0.0
      %1831 = vmatpush1.msra.mxu0 0.0
      %1832 = vmatprep.subr.mxu0 0.0
      %1833 = vmatpush1.msra.mxu0 0.0
      %1834 = vmatprep.subr.mxu0 0.0
      %1835 = vmatpush1.msra.mxu0 0.0
      %1836 = vmatprep.subr.mxu0 0.0
      %1837 = vmatpush1.msra.mxu0 0.0
      %1838 = vmatprep.subr.mxu0 0.0
      %1839 = vmatpush1.msra.mxu0 0.0
      %1840 = vmatprep.subr.mxu0 0.0
      %1841 = vmatpush1.msra.mxu0 0.0
      %1842 = vmatprep.subr.mxu0 0.0
      %1843 = vmatpush1.msra.mxu0 0.0
      %1844 = vmatprep.subr.mxu0 0.0
      %1845 = vmatpush1.msra.mxu0 0.0
      %1846 = vmatprep.subr.mxu0 0.0
      %1847 = vmatpush1.msra.mxu0 0.0
      %1848 = vmatprep.subr.mxu0 0.0
      %1849 = vmatpush1.msra.mxu0 0.0
      %1850 = vmatprep.subr.mxu0 0.0
      %1851 = vmatpush1.msra.mxu0 0.0
      %1852 = vmatprep.subr.mxu0 0.0
      %1853 = vmatpush1.msra.mxu0 0.0
      %1854 = vmatprep.subr.mxu0 0.0
      %1855 = vmatpush1.msra.mxu0 0.0
      %1856 = vmatprep.mubr.f32.mxu0 0.0
      %1857 = vmatmul.mubr.f32.gmra.mrb[0].mxu0 %v1769
      %v1858 = vpop.f32.mrb[0].mxu0
      %v1859 = vadd.f32 0.0, %v1858
      %v1860 = vpop.f32.mrb[0].mxu0
      %1861 = vmatprep.mubr.f32.mxu0 0.0
      %1862 = vmatmul.mubr.f32.gmra.mrb[0].mxu0 %v1772
      %v1863 = vpop.f32.mrb[0].mxu0
      %v1864 = vadd.f32 0.0, %v1863
      %v1865 = vpop.f32.mrb[0].mxu0
      %1866 = vmatprep.mubr.f32.mxu0 0.0
      %1867 = vmatmul.mubr.f32.gmra.mrb[0].mxu0 %v1775
      %v1868 = vpop.f32.mrb[0].mxu0
      %v1869 = vadd.f32 0.0, %v1868
      %v1870 = vpop.f32.mrb[0].mxu0
      %1871 = vmatprep.mubr.f32.mxu0 0.0
      %1872 = vmatmul.mubr.f32.gmra.mrb[0].mxu0 %v1778
      %v1873 = vpop.f32.mrb[0].mxu0
      %v1874 = vadd.f32 0.0, %v1873
      %v1875 = vpop.f32.mrb[0].mxu0
      %1876 = vmatprep.mubr.f32.mxu0 0.0
      %1877 = vmatmul.mubr.f32.gmra.mrb[0].mxu0 %v1781
      %v1878 = vpop.f32.mrb[0].mxu0
      %v1879 = vadd.f32 0.0, %v1878
      %v1880 = vpop.f32.mrb[0].mxu0
      %1881 = vmatprep.mubr.f32.mxu0 0.0
      %1882 = vmatmul.mubr.f32.gmra.mrb[0].mxu0 %v1784
      %v1883 = vpop.f32.mrb[0].mxu0
      %v1884 = vadd.f32 0.0, %v1883
      %v1885 = vpop.f32.mrb[0].mxu0
      %1886 = vmatprep.mubr.f32.mxu0 0.0
      %1887 = vmatmul.mubr.f32.gmra.mrb[0].mxu0 %v1787
      %v1888 = vpop.f32.mrb[0].mxu0
      %v1889 = vadd.f32 0.0, %v1888
      %v1890 = vpop.f32.mrb[0].mxu0
      %1891 = vmatprep.mubr.f32.mxu0 0.0
      %1892 = vmatmul.mubr.f32.gmra.mrb[0].mxu0 %v1790
      %v1893 = vpop.f32.mrb[0].mxu0
      %v1894 = vadd.f32 0.0, %v1893
      %v1895 = vpop.f32.mrb[0].mxu0
      %1896 = vdwg.mxu0
      %v1897 = vsel %vm961, %v1859, 0.0
      %v1898 = vsel %vm962, %v1864, 0.0
      %v1899 = vsel %vm963, %v1869, 0.0
      %v1900 = vsel %vm964, %v1874, 0.0
      %v1901 = vsel %vm965, %v1879, 0.0
      %v1902 = vsel %vm966, %v1884, 0.0
      %v1903 = vsel %vm967, %v1889, 0.0
      %v1904 = vsel %vm968, %v1894, 0.0
      %v1905 = vadd.f32 %v1749, %v1897
      %v1906 = vadd.f32 %v1750, %v1898
      %v1907 = vadd.f32 %v1751, %v1899
      %v1908 = vadd.f32 %v1752, %v1900
      %v1909 = vadd.f32 %v1753, %v1901
      %v1910 = vadd.f32 %v1754, %v1902
      %v1911 = vadd.f32 %v1755, %v1903
      %v1912 = vadd.f32 %v1756, %v1904
      %v1913 = vld [vmem:[#allocation2 + $0x18] sm:$0xff]
      %v1914 = vld [vmem:[#allocation2 + $0x20] sm:$0xff]
      %v1915 = vld [vmem:[#allocation2 + $0x28] sm:$0xff]
      %v1916 = vld [vmem:[#allocation2 + $0x30] sm:$0xff]
      %v1917 = vld [vmem:[#allocation2 + $0x38] sm:$0xff]
      %v1918 = vld [vmem:[#allocation2 + $0x40] sm:$0xff]
      %v1919 = vld [vmem:[#allocation2 + $0x48] sm:$0xff]
      %v1920 = vld [vmem:[#allocation2 + $0x50] sm:$0xff]
      %s1921 = scalar_lea.vmem %s11, 112
      %v1922 = vld [vmem:[%s1921] sm:$0xff]
      %v1923 = vld [vmem:[%s1921 + $0x8] sm:$0xff]
      %v1925 = vsel %vm529, %v1913, 0
      %v1928 = vsel %vm529, %v1914, 0
      %v1931 = vsel %vm529, %v1915, 0
      %v1934 = vsel %vm529, %v1916, 0
      %v1937 = vsel %vm529, %v1917, 0
      %v1940 = vsel %vm529, %v1918, 0
      %v1943 = vsel %vm529, %v1919, 0
      %v1946 = vsel %vm529, %v1920, 0
      %1948 = vmatprep.subr.mxu0 0.0
      %1949 = vmatpush1.msra.mxu0 %v1922
      %1950 = vmatprep.subr.mxu0 0.0
      %1951 = vmatpush1.msra.mxu0 %v1923
      %1952 = vmatprep.subr.mxu0 0.0
      %1953 = vmatpush1.msra.mxu0 0.0
      %1954 = vmatprep.subr.mxu0 0.0
      %1955 = vmatpush1.msra.mxu0 0.0
      %1956 = vmatprep.subr.mxu0 0.0
      %1957 = vmatpush1.msra.mxu0 0.0
      %1958 = vmatprep.subr.mxu0 0.0
      %1959 = vmatpush1.msra.mxu0 0.0
      %1960 = vmatprep.subr.mxu0 0.0
      %1961 = vmatpush1.msra.mxu0 0.0
      %1962 = vmatprep.subr.mxu0 0.0
      %1963 = vmatpush1.msra.mxu0 0.0
      %1964 = vmatprep.subr.mxu0 0.0
      %1965 = vmatpush1.msra.mxu0 0.0
      %1966 = vmatprep.subr.mxu0 0.0
      %1967 = vmatpush1.msra.mxu0 0.0
      %1968 = vmatprep.subr.mxu0 0.0
      %1969 = vmatpush1.msra.mxu0 0.0
      %1970 = vmatprep.subr.mxu0 0.0
      %1971 = vmatpush1.msra.mxu0 0.0
      %1972 = vmatprep.subr.mxu0 0.0
      %1973 = vmatpush1.msra.mxu0 0.0
      %1974 = vmatprep.subr.mxu0 0.0
      %1975 = vmatpush1.msra.mxu0 0.0
      %1976 = vmatprep.subr.mxu0 0.0
      %1977 = vmatpush1.msra.mxu0 0.0
      %1978 = vmatprep.subr.mxu0 0.0
      %1979 = vmatpush1.msra.mxu0 0.0
      %1980 = vmatprep.subr.mxu0 0.0
      %1981 = vmatpush1.msra.mxu0 0.0
      %1982 = vmatprep.subr.mxu0 0.0
      %1983 = vmatpush1.msra.mxu0 0.0
      %1984 = vmatprep.subr.mxu0 0.0
      %1985 = vmatpush1.msra.mxu0 0.0
      %1986 = vmatprep.subr.mxu0 0.0
      %1987 = vmatpush1.msra.mxu0 0.0
      %1988 = vmatprep.subr.mxu0 0.0
      %1989 = vmatpush1.msra.mxu0 0.0
      %1990 = vmatprep.subr.mxu0 0.0
      %1991 = vmatpush1.msra.mxu0 0.0
      %1992 = vmatprep.subr.mxu0 0.0
      %1993 = vmatpush1.msra.mxu0 0.0
      %1994 = vmatprep.subr.mxu0 0.0
      %1995 = vmatpush1.msra.mxu0 0.0
      %1996 = vmatprep.subr.mxu0 0.0
      %1997 = vmatpush1.msra.mxu0 0.0
      %1998 = vmatprep.subr.mxu0 0.0
      %1999 = vmatpush1.msra.mxu0 0.0
      %2000 = vmatprep.subr.mxu0 0.0
      %2001 = vmatpush1.msra.mxu0 0.0
      %2002 = vmatprep.subr.mxu0 0.0
      %2003 = vmatpush1.msra.mxu0 0.0
      %2004 = vmatprep.subr.mxu0 0.0
      %2005 = vmatpush1.msra.mxu0 0.0
      %2006 = vmatprep.subr.mxu0 0.0
      %2007 = vmatpush1.msra.mxu0 0.0
      %2008 = vmatprep.subr.mxu0 0.0
      %2009 = vmatpush1.msra.mxu0 0.0
      %2010 = vmatprep.subr.mxu0 0.0
      %2011 = vmatpush1.msra.mxu0 0.0
      %2012 = vmatprep.mubr.f32.mxu0 0.0
      %2013 = vmatmul.mubr.f32.gmra.mrb[0].mxu0 %v1925
      %v2014 = vpop.f32.mrb[0].mxu0
      %v2015 = vadd.f32 0.0, %v2014
      %v2016 = vpop.f32.mrb[0].mxu0
      %2017 = vmatprep.mubr.f32.mxu0 0.0
      %2018 = vmatmul.mubr.f32.gmra.mrb[0].mxu0 %v1928
      %v2019 = vpop.f32.mrb[0].mxu0
      %v2020 = vadd.f32 0.0, %v2019
      %v2021 = vpop.f32.mrb[0].mxu0
      %2022 = vmatprep.mubr.f32.mxu0 0.0
      %2023 = vmatmul.mubr.f32.gmra.mrb[0].mxu0 %v1931
      %v2024 = vpop.f32.mrb[0].mxu0
      %v2025 = vadd.f32 0.0, %v2024
      %v2026 = vpop.f32.mrb[0].mxu0
      %2027 = vmatprep.mubr.f32.mxu0 0.0
      %2028 = vmatmul.mubr.f32.gmra.mrb[0].mxu0 %v1934
      %v2029 = vpop.f32.mrb[0].mxu0
      %v2030 = vadd.f32 0.0, %v2029
      %v2031 = vpop.f32.mrb[0].mxu0
      %2032 = vmatprep.mubr.f32.mxu0 0.0
      %2033 = vmatmul.mubr.f32.gmra.mrb[0].mxu0 %v1937
      %v2034 = vpop.f32.mrb[0].mxu0
      %v2035 = vadd.f32 0.0, %v2034
      %v2036 = vpop.f32.mrb[0].mxu0
      %2037 = vmatprep.mubr.f32.mxu0 0.0
      %2038 = vmatmul.mubr.f32.gmra.mrb[0].mxu0 %v1940
      %v2039 = vpop.f32.mrb[0].mxu0
      %v2040 = vadd.f32 0.0, %v2039
      %v2041 = vpop.f32.mrb[0].mxu0
      %2042 = vmatprep.mubr.f32.mxu0 0.0
      %2043 = vmatmul.mubr.f32.gmra.mrb[0].mxu0 %v1943
      %v2044 = vpop.f32.mrb[0].mxu0
      %v2045 = vadd.f32 0.0, %v2044
      %v2046 = vpop.f32.mrb[0].mxu0
      %2047 = vmatprep.mubr.f32.mxu0 0.0
      %2048 = vmatmul.mubr.f32.gmra.mrb[0].mxu0 %v1946
      %v2049 = vpop.f32.mrb[0].mxu0
      %v2050 = vadd.f32 0.0, %v2049
      %v2051 = vpop.f32.mrb[0].mxu0
      %2052 = vdwg.mxu0
      %v2053 = vadd.f32 %v1905, %v2015
      %v2054 = vadd.f32 %v1906, %v2020
      %v2055 = vadd.f32 %v1907, %v2025
      %v2056 = vadd.f32 %v1908, %v2030
      %v2057 = vadd.f32 %v1909, %v2035
      %v2058 = vadd.f32 %v1910, %v2040
      %v2059 = vadd.f32 %v1911, %v2045
      %v2060 = vadd.f32 %v1912, %v2050
      %v2061 = vld [vmem:[#allocation2 + $0x19] sm:$0xff]
      %v2062 = vld [vmem:[#allocation2 + $0x21] sm:$0xff]
      %v2063 = vld [vmem:[#allocation2 + $0x29] sm:$0xff]
      %v2064 = vld [vmem:[#allocation2 + $0x31] sm:$0xff]
      %v2065 = vld [vmem:[#allocation2 + $0x39] sm:$0xff]
      %v2066 = vld [vmem:[#allocation2 + $0x41] sm:$0xff]
      %v2067 = vld [vmem:[#allocation2 + $0x49] sm:$0xff]
      %v2068 = vld [vmem:[#allocation2 + $0x51] sm:$0xff]
      %s2069 = scalar_lea.vmem %s11, 128
      %v2070 = vld [vmem:[%s2069] sm:$0xff]
      %v2071 = vld [vmem:[%s2069 + $0x8] sm:$0xff]
      %v2073 = vsel %vm529, %v2061, 0
      %v2076 = vsel %vm529, %v2062, 0
      %v2079 = vsel %vm529, %v2063, 0
      %v2082 = vsel %vm529, %v2064, 0
      %v2085 = vsel %vm529, %v2065, 0
      %v2088 = vsel %vm529, %v2066, 0
      %v2091 = vsel %vm529, %v2067, 0
      %v2094 = vsel %vm529, %v2068, 0
      %2096 = vmatprep.subr.mxu0 0.0
      %2097 = vmatpush1.msra.mxu0 %v2070
      %2098 = vmatprep.subr.mxu0 0.0
      %2099 = vmatpush1.msra.mxu0 %v2071
      %2100 = vmatprep.subr.mxu0 0.0
      %2101 = vmatpush1.msra.mxu0 0.0
      %2102 = vmatprep.subr.mxu0 0.0
      %2103 = vmatpush1.msra.mxu0 0.0
      %2104 = vmatprep.subr.mxu0 0.0
      %2105 = vmatpush1.msra.mxu0 0.0
      %2106 = vmatprep.subr.mxu0 0.0
      %2107 = vmatpush1.msra.mxu0 0.0
      %2108 = vmatprep.subr.mxu0 0.0
      %2109 = vmatpush1.msra.mxu0 0.0
      %2110 = vmatprep.subr.mxu0 0.0
      %2111 = vmatpush1.msra.mxu0 0.0
      %2112 = vmatprep.subr.mxu0 0.0
      %2113 = vmatpush1.msra.mxu0 0.0
      %2114 = vmatprep.subr.mxu0 0.0
      %2115 = vmatpush1.msra.mxu0 0.0
      %2116 = vmatprep.subr.mxu0 0.0
      %2117 = vmatpush1.msra.mxu0 0.0
      %2118 = vmatprep.subr.mxu0 0.0
      %2119 = vmatpush1.msra.mxu0 0.0
      %2120 = vmatprep.subr.mxu0 0.0
      %2121 = vmatpush1.msra.mxu0 0.0
      %2122 = vmatprep.subr.mxu0 0.0
      %2123 = vmatpush1.msra.mxu0 0.0
      %2124 = vmatprep.subr.mxu0 0.0
      %2125 = vmatpush1.msra.mxu0 0.0
      %2126 = vmatprep.subr.mxu0 0.0
      %2127 = vmatpush1.msra.mxu0 0.0
      %2128 = vmatprep.subr.mxu0 0.0
      %2129 = vmatpush1.msra.mxu0 0.0
      %2130 = vmatprep.subr.mxu0 0.0
      %2131 = vmatpush1.msra.mxu0 0.0
      %2132 = vmatprep.subr.mxu0 0.0
      %2133 = vmatpush1.msra.mxu0 0.0
      %2134 = vmatprep.subr.mxu0 0.0
      %2135 = vmatpush1.msra.mxu0 0.0
      %2136 = vmatprep.subr.mxu0 0.0
      %2137 = vmatpush1.msra.mxu0 0.0
      %2138 = vmatprep.subr.mxu0 0.0
      %2139 = vmatpush1.msra.mxu0 0.0
      %2140 = vmatprep.subr.mxu0 0.0
      %2141 = vmatpush1.msra.mxu0 0.0
      %2142 = vmatprep.subr.mxu0 0.0
      %2143 = vmatpush1.msra.mxu0 0.0
      %2144 = vmatprep.subr.mxu0 0.0
      %2145 = vmatpush1.msra.mxu0 0.0
      %2146 = vmatprep.subr.mxu0 0.0
      %2147 = vmatpush1.msra.mxu0 0.0
      %2148 = vmatprep.subr.mxu0 0.0
      %2149 = vmatpush1.msra.mxu0 0.0
      %2150 = vmatprep.subr.mxu0 0.0
      %2151 = vmatpush1.msra.mxu0 0.0
      %2152 = vmatprep.subr.mxu0 0.0
      %2153 = vmatpush1.msra.mxu0 0.0
      %2154 = vmatprep.subr.mxu0 0.0
      %2155 = vmatpush1.msra.mxu0 0.0
      %2156 = vmatprep.subr.mxu0 0.0
      %2157 = vmatpush1.msra.mxu0 0.0
      %2158 = vmatprep.subr.mxu0 0.0
      %2159 = vmatpush1.msra.mxu0 0.0
      %2160 = vmatprep.mubr.f32.mxu0 0.0
      %2161 = vmatmul.mubr.f32.gmra.mrb[0].mxu0 %v2073
      %v2162 = vpop.f32.mrb[0].mxu0
      %v2163 = vadd.f32 0.0, %v2162
      %v2164 = vpop.f32.mrb[0].mxu0
      %2165 = vmatprep.mubr.f32.mxu0 0.0
      %2166 = vmatmul.mubr.f32.gmra.mrb[0].mxu0 %v2076
      %v2167 = vpop.f32.mrb[0].mxu0
      %v2168 = vadd.f32 0.0, %v2167
      %v2169 = vpop.f32.mrb[0].mxu0
      %2170 = vmatprep.mubr.f32.mxu0 0.0
      %2171 = vmatmul.mubr.f32.gmra.mrb[0].mxu0 %v2079
      %v2172 = vpop.f32.mrb[0].mxu0
      %v2173 = vadd.f32 0.0, %v2172
      %v2174 = vpop.f32.mrb[0].mxu0
      %2175 = vmatprep.mubr.f32.mxu0 0.0
      %2176 = vmatmul.mubr.f32.gmra.mrb[0].mxu0 %v2082
      %v2177 = vpop.f32.mrb[0].mxu0
      %v2178 = vadd.f32 0.0, %v2177
      %v2179 = vpop.f32.mrb[0].mxu0
      %2180 = vmatprep.mubr.f32.mxu0 0.0
      %2181 = vmatmul.mubr.f32.gmra.mrb[0].mxu0 %v2085
      %v2182 = vpop.f32.mrb[0].mxu0
      %v2183 = vadd.f32 0.0, %v2182
      %v2184 = vpop.f32.mrb[0].mxu0
      %2185 = vmatprep.mubr.f32.mxu0 0.0
      %2186 = vmatmul.mubr.f32.gmra.mrb[0].mxu0 %v2088
      %v2187 = vpop.f32.mrb[0].mxu0
      %v2188 = vadd.f32 0.0, %v2187
      %v2189 = vpop.f32.mrb[0].mxu0
      %2190 = vmatprep.mubr.f32.mxu0 0.0
      %2191 = vmatmul.mubr.f32.gmra.mrb[0].mxu0 %v2091
      %v2192 = vpop.f32.mrb[0].mxu0
      %v2193 = vadd.f32 0.0, %v2192
      %v2194 = vpop.f32.mrb[0].mxu0
      %2195 = vmatprep.mubr.f32.mxu0 0.0
      %2196 = vmatmul.mubr.f32.gmra.mrb[0].mxu0 %v2094
      %v2197 = vpop.f32.mrb[0].mxu0
      %v2198 = vadd.f32 0.0, %v2197
      %v2199 = vpop.f32.mrb[0].mxu0
      %2200 = vdwg.mxu0
      %v2201 = vsel %vm1273, %v2163, 0.0
      %v2202 = vsel %vm1274, %v2168, 0.0
      %v2203 = vsel %vm1275, %v2173, 0.0
      %v2204 = vsel %vm1276, %v2178, 0.0
      %v2205 = vsel %vm1277, %v2183, 0.0
      %v2206 = vsel %vm1278, %v2188, 0.0
      %v2207 = vsel %vm1279, %v2193, 0.0
      %v2208 = vsel %vm1280, %v2198, 0.0
      %v2209 = vadd.f32 %v2053, %v2201
      %v2210 = vadd.f32 %v2054, %v2202
      %v2211 = vadd.f32 %v2055, %v2203
      %v2212 = vadd.f32 %v2056, %v2204
      %v2213 = vadd.f32 %v2057, %v2205
      %v2214 = vadd.f32 %v2058, %v2206
      %v2215 = vadd.f32 %v2059, %v2207
      %v2216 = vadd.f32 %v2060, %v2208
      %v2217 = vld [vmem:[%s7] sm:$0x1]
      %v2219 = vlaneseq
      %v2220 = vshrl.u32 %v2219, 7
      %v2221 = vsub.s32 0, %v2220
      %v2222 = vrot.slane %v2217, %v2221
      %v2224 = vmul.f32 %v2209, %v2222
      %v2225 = vmul.f32 %v2210, %v2222
      %v2226 = vmul.f32 %v2211, %v2222
      %v2227 = vmul.f32 %v2212, %v2222
      %v2228 = vmul.f32 %v2213, %v2222
      %v2229 = vmul.f32 %v2214, %v2222
      %v2230 = vmul.f32 %v2215, %v2222
      %v2231 = vmul.f32 %v2216, %v2222
      %v2232 = vld [vmem:[%s8] sm:$0x1]
      %v2234 = vlaneseq
      %v2235 = vshrl.u32 %v2234, 7
      %v2236 = vsub.s32 0, %v2235
      %v2237 = vrot.slane %v2232, %v2236
      %v2239 = vadd.f32 %v2224, %v2237
      %v2240 = vadd.f32 %v2225, %v2237
      %v2241 = vadd.f32 %v2226, %v2237
      %v2242 = vadd.f32 %v2227, %v2237
      %v2243 = vadd.f32 %v2228, %v2237
      %v2244 = vadd.f32 %v2229, %v2237
      %v2245 = vadd.f32 %v2230, %v2237
      %v2246 = vadd.f32 %v2231, %v2237
      %v2247 = vmax.f32 %v2239, 0.0
      %v2248 = vmax.f32 %v2240, 0.0
      %v2249 = vmax.f32 %v2241, 0.0
      %v2250 = vmax.f32 %v2242, 0.0
      %v2251 = vmax.f32 %v2243, 0.0
      %v2252 = vmax.f32 %v2244, 0.0
      %v2253 = vmax.f32 %v2245, 0.0
      %v2254 = vmax.f32 %v2246, 0.0
      %v2255 = vld [vmem:[%s12] sm:$0xff]
      %v2256 = vld [vmem:[%s12 + $0x8] sm:$0xff]
      %v2258 = vsel %vm529, %v2247, 0
      %v2261 = vsel %vm529, %v2248, 0
      %v2264 = vsel %vm529, %v2249, 0
      %v2267 = vsel %vm529, %v2250, 0
      %v2270 = vsel %vm529, %v2251, 0
      %v2273 = vsel %vm529, %v2252, 0
      %v2276 = vsel %vm529, %v2253, 0
      %v2279 = vsel %vm529, %v2254, 0
      %2281 = vmatprep.subr.mxu0 0.0
      %2282 = vmatpush1.msra.mxu0 %v2255
      %2283 = vmatprep.subr.mxu0 0.0
      %2284 = vmatpush1.msra.mxu0 %v2256
      %2285 = vmatprep.subr.mxu0 0.0
      %2286 = vmatpush1.msra.mxu0 0.0
      %2287 = vmatprep.subr.mxu0 0.0
      %2288 = vmatpush1.msra.mxu0 0.0
      %2289 = vmatprep.subr.mxu0 0.0
      %2290 = vmatpush1.msra.mxu0 0.0
      %2291 = vmatprep.subr.mxu0 0.0
      %2292 = vmatpush1.msra.mxu0 0.0
      %2293 = vmatprep.subr.mxu0 0.0
      %2294 = vmatpush1.msra.mxu0 0.0
      %2295 = vmatprep.subr.mxu0 0.0
      %2296 = vmatpush1.msra.mxu0 0.0
      %2297 = vmatprep.subr.mxu0 0.0
      %2298 = vmatpush1.msra.mxu0 0.0
      %2299 = vmatprep.subr.mxu0 0.0
      %2300 = vmatpush1.msra.mxu0 0.0
      %2301 = vmatprep.subr.mxu0 0.0
      %2302 = vmatpush1.msra.mxu0 0.0
      %2303 = vmatprep.subr.mxu0 0.0
      %2304 = vmatpush1.msra.mxu0 0.0
      %2305 = vmatprep.subr.mxu0 0.0
      %2306 = vmatpush1.msra.mxu0 0.0
      %2307 = vmatprep.subr.mxu0 0.0
      %2308 = vmatpush1.msra.mxu0 0.0
      %2309 = vmatprep.subr.mxu0 0.0
      %2310 = vmatpush1.msra.mxu0 0.0
      %2311 = vmatprep.subr.mxu0 0.0
      %2312 = vmatpush1.msra.mxu0 0.0
      %2313 = vmatprep.subr.mxu0 0.0
      %2314 = vmatpush1.msra.mxu0 0.0
      %2315 = vmatprep.subr.mxu0 0.0
      %2316 = vmatpush1.msra.mxu0 0.0
      %2317 = vmatprep.subr.mxu0 0.0
      %2318 = vmatpush1.msra.mxu0 0.0
      %2319 = vmatprep.subr.mxu0 0.0
      %2320 = vmatpush1.msra.mxu0 0.0
      %2321 = vmatprep.subr.mxu0 0.0
      %2322 = vmatpush1.msra.mxu0 0.0
      %2323 = vmatprep.subr.mxu0 0.0
      %2324 = vmatpush1.msra.mxu0 0.0
      %2325 = vmatprep.subr.mxu0 0.0
      %2326 = vmatpush1.msra.mxu0 0.0
      %2327 = vmatprep.subr.mxu0 0.0
      %2328 = vmatpush1.msra.mxu0 0.0
      %2329 = vmatprep.subr.mxu0 0.0
      %2330 = vmatpush1.msra.mxu0 0.0
      %2331 = vmatprep.subr.mxu0 0.0
      %2332 = vmatpush1.msra.mxu0 0.0
      %2333 = vmatprep.subr.mxu0 0.0
      %2334 = vmatpush1.msra.mxu0 0.0
      %2335 = vmatprep.subr.mxu0 0.0
      %2336 = vmatpush1.msra.mxu0 0.0
      %2337 = vmatprep.subr.mxu0 0.0
      %2338 = vmatpush1.msra.mxu0 0.0
      %2339 = vmatprep.subr.mxu0 0.0
      %2340 = vmatpush1.msra.mxu0 0.0
      %2341 = vmatprep.subr.mxu0 0.0
      %2342 = vmatpush1.msra.mxu0 0.0
      %2343 = vmatprep.subr.mxu0 0.0
      %2344 = vmatpush1.msra.mxu0 0.0
      %2345 = vmatprep.mubr.f32.mxu0 0.0
      %2346 = vmatmul.mubr.f32.gmra.mrb[0].mxu0 %v2258
      %v2347 = vpop.f32.mrb[0].mxu0
      %v2348 = vadd.f32 0.0, %v2347
      %v2349 = vpop.f32.mrb[0].mxu0
      %2350 = vmatprep.mubr.f32.mxu0 0.0
      %2351 = vmatmul.mubr.f32.gmra.mrb[0].mxu0 %v2261
      %v2352 = vpop.f32.mrb[0].mxu0
      %v2353 = vadd.f32 0.0, %v2352
      %v2354 = vpop.f32.mrb[0].mxu0
      %2355 = vmatprep.mubr.f32.mxu0 0.0
      %2356 = vmatmul.mubr.f32.gmra.mrb[0].mxu0 %v2264
      %v2357 = vpop.f32.mrb[0].mxu0
      %v2358 = vadd.f32 0.0, %v2357
      %v2359 = vpop.f32.mrb[0].mxu0
      %2360 = vmatprep.mubr.f32.mxu0 0.0
      %2361 = vmatmul.mubr.f32.gmra.mrb[0].mxu0 %v2267
      %v2362 = vpop.f32.mrb[0].mxu0
      %v2363 = vadd.f32 0.0, %v2362
      %v2364 = vpop.f32.mrb[0].mxu0
      %2365 = vmatprep.mubr.f32.mxu0 0.0
      %2366 = vmatmul.mubr.f32.gmra.mrb[0].mxu0 %v2270
      %v2367 = vpop.f32.mrb[0].mxu0
      %v2368 = vadd.f32 0.0, %v2367
      %v2369 = vpop.f32.mrb[0].mxu0
      %2370 = vmatprep.mubr.f32.mxu0 0.0
      %2371 = vmatmul.mubr.f32.gmra.mrb[0].mxu0 %v2273
      %v2372 = vpop.f32.mrb[0].mxu0
      %v2373 = vadd.f32 0.0, %v2372
      %v2374 = vpop.f32.mrb[0].mxu0
      %2375 = vmatprep.mubr.f32.mxu0 0.0
      %2376 = vmatmul.mubr.f32.gmra.mrb[0].mxu0 %v2276
      %v2377 = vpop.f32.mrb[0].mxu0
      %v2378 = vadd.f32 0.0, %v2377
      %v2379 = vpop.f32.mrb[0].mxu0
      %2380 = vmatprep.mubr.f32.mxu0 0.0
      %2381 = vmatmul.mubr.f32.gmra.mrb[0].mxu0 %v2279
      %v2382 = vpop.f32.mrb[0].mxu0
      %v2383 = vadd.f32 0.0, %v2382
      %v2384 = vpop.f32.mrb[0].mxu0
      %2385 = vdwg.mxu0
      %v2387 = vsel %vm529, %v479, 0
      %v2390 = vsel %vm529, %v480, 0
      %v2393 = vsel %vm529, %v481, 0
      %v2396 = vsel %vm529, %v482, 0
      %v2399 = vsel %vm529, %v483, 0
      %v2402 = vsel %vm529, %v484, 0
      %v2405 = vsel %vm529, %v485, 0
      %v2408 = vsel %vm529, %v486, 0
      %2410 = vmatprep.subr.mxu0 0.0
      %2411 = vmatpush1.msra.mxu0 %v487
      %2412 = vmatprep.subr.mxu0 0.0
      %2413 = vmatpush1.msra.mxu0 %v488
      %2414 = vmatprep.subr.mxu0 0.0
      %2415 = vmatpush1.msra.mxu0 0.0
      %2416 = vmatprep.subr.mxu0 0.0
      %2417 = vmatpush1.msra.mxu0 0.0
      %2418 = vmatprep.subr.mxu0 0.0
      %2419 = vmatpush1.msra.mxu0 0.0
      %2420 = vmatprep.subr.mxu0 0.0
      %2421 = vmatpush1.msra.mxu0 0.0
      %2422 = vmatprep.subr.mxu0 0.0
      %2423 = vmatpush1.msra.mxu0 0.0
      %2424 = vmatprep.subr.mxu0 0.0
      %2425 = vmatpush1.msra.mxu0 0.0
      %2426 = vmatprep.subr.mxu0 0.0
      %2427 = vmatpush1.msra.mxu0 0.0
      %2428 = vmatprep.subr.mxu0 0.0
      %2429 = vmatpush1.msra.mxu0 0.0
      %2430 = vmatprep.subr.mxu0 0.0
      %2431 = vmatpush1.msra.mxu0 0.0
      %2432 = vmatprep.subr.mxu0 0.0
      %2433 = vmatpush1.msra.mxu0 0.0
      %2434 = vmatprep.subr.mxu0 0.0
      %2435 = vmatpush1.msra.mxu0 0.0
      %2436 = vmatprep.subr.mxu0 0.0
      %2437 = vmatpush1.msra.mxu0 0.0
      %2438 = vmatprep.subr.mxu0 0.0
      %2439 = vmatpush1.msra.mxu0 0.0
      %2440 = vmatprep.subr.mxu0 0.0
      %2441 = vmatpush1.msra.mxu0 0.0
      %2442 = vmatprep.subr.mxu0 0.0
      %2443 = vmatpush1.msra.mxu0 0.0
      %2444 = vmatprep.subr.mxu0 0.0
      %2445 = vmatpush1.msra.mxu0 0.0
      %2446 = vmatprep.subr.mxu0 0.0
      %2447 = vmatpush1.msra.mxu0 0.0
      %2448 = vmatprep.subr.mxu0 0.0
      %2449 = vmatpush1.msra.mxu0 0.0
      %2450 = vmatprep.subr.mxu0 0.0
      %2451 = vmatpush1.msra.mxu0 0.0
      %2452 = vmatprep.subr.mxu0 0.0
      %2453 = vmatpush1.msra.mxu0 0.0
      %2454 = vmatprep.subr.mxu0 0.0
      %2455 = vmatpush1.msra.mxu0 0.0
      %2456 = vmatprep.subr.mxu0 0.0
      %2457 = vmatpush1.msra.mxu0 0.0
      %2458 = vmatprep.subr.mxu0 0.0
      %2459 = vmatpush1.msra.mxu0 0.0
      %2460 = vmatprep.subr.mxu0 0.0
      %2461 = vmatpush1.msra.mxu0 0.0
      %2462 = vmatprep.subr.mxu0 0.0
      %2463 = vmatpush1.msra.mxu0 0.0
      %2464 = vmatprep.subr.mxu0 0.0
      %2465 = vmatpush1.msra.mxu0 0.0
      %2466 = vmatprep.subr.mxu0 0.0
      %2467 = vmatpush1.msra.mxu0 0.0
      %2468 = vmatprep.subr.mxu0 0.0
      %2469 = vmatpush1.msra.mxu0 0.0
      %2470 = vmatprep.subr.mxu0 0.0
      %2471 = vmatpush1.msra.mxu0 0.0
      %2472 = vmatprep.subr.mxu0 0.0
      %2473 = vmatpush1.msra.mxu0 0.0
      %2474 = vmatprep.mubr.f32.mxu0 0.0
      %2475 = vmatmul.mubr.f32.gmra.mrb[0].mxu0 %v2387
      %v2476 = vpop.f32.mrb[0].mxu0
      %v2477 = vadd.f32 %v2348, %v2476
      %v2478 = vpop.f32.mrb[0].mxu0
      %2479 = vmatprep.mubr.f32.mxu0 0.0
      %2480 = vmatmul.mubr.f32.gmra.mrb[0].mxu0 %v2390
      %v2481 = vpop.f32.mrb[0].mxu0
      %v2482 = vadd.f32 %v2353, %v2481
      %v2483 = vpop.f32.mrb[0].mxu0
      %2484 = vmatprep.mubr.f32.mxu0 0.0
      %2485 = vmatmul.mubr.f32.gmra.mrb[0].mxu0 %v2393
      %v2486 = vpop.f32.mrb[0].mxu0
      %v2487 = vadd.f32 %v2358, %v2486
      %v2488 = vpop.f32.mrb[0].mxu0
      %2489 = vmatprep.mubr.f32.mxu0 0.0
      %2490 = vmatmul.mubr.f32.gmra.mrb[0].mxu0 %v2396
      %v2491 = vpop.f32.mrb[0].mxu0
      %v2492 = vadd.f32 %v2363, %v2491
      %v2493 = vpop.f32.mrb[0].mxu0
      %2494 = vmatprep.mubr.f32.mxu0 0.0
      %2495 = vmatmul.mubr.f32.gmra.mrb[0].mxu0 %v2399
      %v2496 = vpop.f32.mrb[0].mxu0
      %v2497 = vadd.f32 %v2368, %v2496
      %v2498 = vpop.f32.mrb[0].mxu0
      %2499 = vmatprep.mubr.f32.mxu0 0.0
      %2500 = vmatmul.mubr.f32.gmra.mrb[0].mxu0 %v2402
      %v2501 = vpop.f32.mrb[0].mxu0
      %v2502 = vadd.f32 %v2373, %v2501
      %v2503 = vpop.f32.mrb[0].mxu0
      %2504 = vmatprep.mubr.f32.mxu0 0.0
      %2505 = vmatmul.mubr.f32.gmra.mrb[0].mxu0 %v2405
      %v2506 = vpop.f32.mrb[0].mxu0
      %v2507 = vadd.f32 %v2378, %v2506
      %v2508 = vpop.f32.mrb[0].mxu0
      %2509 = vmatprep.mubr.f32.mxu0 0.0
      %2510 = vmatmul.mubr.f32.gmra.mrb[0].mxu0 %v2408
      %v2511 = vpop.f32.mrb[0].mxu0
      %v2512 = vadd.f32 %v2383, %v2511
      %v2513 = vpop.f32.mrb[0].mxu0
      %2514 = vdwg.mxu0
      %vm2515 = vcmask 326656
      %2516 = vst.msk [vmem:[%s440] sm:$0xff] %vm2515, %v2477
      %2517 = vst.msk [vmem:[%s440 + $0x8] sm:$0xff] %vm2515, %v2482
      %2518 = vst.msk [vmem:[%s440 + $0x10] sm:$0xff] %vm2515, %v2487
      %2519 = vst.msk [vmem:[%s440 + $0x18] sm:$0xff] %vm2515, %v2492
      %2520 = vst.msk [vmem:[%s440 + $0x20] sm:$0xff] %vm2515, %v2497
      %2521 = vst.msk [vmem:[%s440 + $0x28] sm:$0xff] %vm2515, %v2502
      %2522 = vst.msk [vmem:[%s440 + $0x30] sm:$0xff] %vm2515, %v2507
      %2523 = vst.msk [vmem:[%s440 + $0x38] sm:$0xff] %vm2515, %v2512
      %p2524 = scmp.lt.s32.totalorder %s24, 1
      %s2525 = scalar_select %p2524, %s24, 1
      %s2526 = smul.addr %s2525, 8
      %s2527 = smul.addr %s2526, 8
      %s2528 = scalar_lea.vmem %s13, %s2527
      // Predicated region
      $region73: #{_lambda_.1} parent=71 // pred_check
        %p2529 = pneg %p320
      $region74: #{_lambda_.1} parent=71 // pred_check_branch
        %2531 = sbr.rel (%p2529) target = $region76
      $region75: #{_lambda_.1} parent=71 // pred_region
        _
      $region76: #{_lambda_.1} parent=71 // pred_fallthru
        _
    $region72: #{_lambda_.1} parent=5 // pred_fallthru
      _
    %p2532 = scmp.le.s32.totalorder 2, %s19
    // Predicated region
    $region77: #{_lambda_.1} parent=5 // pred_check
      %p2533 = pneg %p2532
    $region78: #{_lambda_.1} parent=5 // pred_check_branch
      %2535 = sbr.rel (%p2533) target = $region80
    $region79: #{_lambda_.1} parent=5 // pred_region
      %s2536 = ssub.s32 %s19, 2
      // Predicated region
      $region81: #{_lambda_.1} parent=79 // pred_check
        %p2537 = pneg %p326
      $region82: #{_lambda_.1} parent=79 // pred_check_branch
        %2539 = sbr.rel (%p2537) target = $region84
      $region83: #{_lambda_.1} parent=79 // pred_region
        %p2540 = scmp.lt.s32.totalorder %s25, 1
        %s2541 = scalar_select %p2540, %s25, 1
        %s2542 = smul.addr %s2541, 8
        %s2543 = smul.addr %s2542, 8
        %s2544 = scalar_lea.vmem %s13, %s2543
      $region84: #{_lambda_.1} parent=79 // pred_fallthru
        _
    $region80: #{_lambda_.1} parent=5 // pred_fallthru
      _
  $region6: #{_lambda_.1} parent=0 // loop_footer
    %s23 = sadd.s32 1, %s19
  $region7: #{_lambda_.1} parent=0 // loop_footer_branch
    %18 = sbr.rel target = $region3
  $region8: #{_lambda_.1} parent=0 // loop_exit
    _

</llo_original>
